<compile_context>
chip_gen: v7x
topology: tpu7x:2x2x1
jax: 0.10.0
libtpu: 0.0.40
codegen_flags: <defaults>
</compile_context>

<pallas_src>
import jax
import jax.numpy as jnp
from jax.experimental import pallas as pl
from jax.experimental.pallas import tpu as pltpu


# ----------------------------------------------------------------------------
# Pallas kernel: fused 3-layer conditional MLP on one (batch, row-block) tile.
#   h1 = softplus(y@W1y + e@W1e + tproj)      tproj = t_emb@W1t + b1  (per batch)
#   h2 = softplus(h1@W2 + b2)
#   o  = h2@W3 + b3
# bf16 MXU operands, f32 accumulation, f32 elementwise (v5e has no bf16 VPU).
# ----------------------------------------------------------------------------
def _denoise_mlp_kernel(y_ref, e_ref, tproj_ref,
                        w1y_ref, w1e_ref, w2_ref, b2_ref, w3_ref, b3_ref,
                        o_ref):
    y = y_ref[0].astype(jnp.bfloat16)                       # [TL, D]
    e = e_ref[0].astype(jnp.bfloat16)                       # [TL, D]

    h1 = jnp.dot(y, w1y_ref[...], preferred_element_type=jnp.float32)
    h1 = h1 + jnp.dot(e, w1e_ref[...], preferred_element_type=jnp.float32)
    h1 = h1 + tproj_ref[0]                                  # [1,H] bcast; b1 folded in
    h1 = jax.nn.softplus(h1)                                # [TL, H] f32

    h2 = jnp.dot(h1.astype(jnp.bfloat16), w2_ref[...],
                 preferred_element_type=jnp.float32) + b2_ref[...]
    h2 = jax.nn.softplus(h2)                                # [TL, H] f32

    out = jnp.dot(h2.astype(jnp.bfloat16), w3_ref[...],
                  preferred_element_type=jnp.float32) + b3_ref[...]
    o_ref[0] = out.astype(o_ref.dtype)                      # [TL, D]


def fused_denoise_mlp(y_t, enc_out, t_proj,
                      w1y, w1e, w2, b2, w3, b3, *, tile_rows=256):
    """y_t/enc_out: [B, L, D] f32, t_proj: [B, 1, H] f32 -> [B, L, D] f32."""
    B, L, D = y_t.shape
    H = w2.shape[0]

    tile_l = min(tile_rows, L)
    n_l = -(-L // tile_l)
    l_pad = n_l * tile_l
    if l_pad != L:
        pad = ((0, 0), (0, l_pad - L), (0, 0))
        y_t = jnp.pad(y_t, pad)
        enc_out = jnp.pad(enc_out, pad)

    grid = (B, n_l)
    row_map = lambda b, l: (b, l, 0)
    const2 = lambda b, l: (0, 0)

    rows = B * l_pad
    flops = 2 * rows * (2 * D * H + H * H + H * D)
    bytes_accessed = (3 * rows * D * 4                      # y, enc in; out (f32)
                      + (2 * D * H + H * H + H * D) * 2     # bf16 weights
                      + (B + 1) * H * 4 + D * 4)            # t_proj, b2, b3
    cost = pl.CostEstimate(flops=flops,
                           transcendentals=2 * rows * H,
                           bytes_accessed=bytes_accessed)

    out = pl.pallas_call(
        _denoise_mlp_kernel,
        out_shape=jax.ShapeDtypeStruct((B, l_pad, D), y_t.dtype),
        grid_spec=pltpu.PrefetchScalarGridSpec(
            num_scalar_prefetch=0,
            grid=grid,
            in_specs=[
                pl.BlockSpec((1, tile_l, D), row_map),      # y_t tile
                pl.BlockSpec((1, tile_l, D), row_map),      # enc_out tile
                pl.BlockSpec((1, 1, H), lambda b, l: (b, 0, 0)),  # per-batch t proj
                pl.BlockSpec((D, H), const2),               # W1_y (bf16)
                pl.BlockSpec((D, H), const2),               # W1_e (bf16)
                pl.BlockSpec((H, H), const2),               # W2   (bf16)
                pl.BlockSpec((1, H), const2),               # b2   (f32)
                pl.BlockSpec((H, D), const2),               # W3   (bf16)
                pl.BlockSpec((1, D), const2),               # b3   (f32)
            ],
            out_specs=pl.BlockSpec((1, tile_l, D), row_map),
        ),
        compiler_params=pltpu.CompilerParams(
            dimension_semantics=("parallel", "parallel"),
            vmem_limit_bytes=32 * 1024 * 1024,
        ),
        cost_estimate=cost,
    )(y_t, enc_out, t_proj, w1y, w1e, w2, b2, w3, b3)

    if l_pad != L:
        out = out[:, :L, :]
    return out


# ----------------------------------------------------------------------------
# Glue: sinusoidal diffusion-step embedding (tiny, [B, E]) + model wrapper.
# ----------------------------------------------------------------------------
def timestep_embedding(t, dim):
    """t: [B] int32 -> [B, dim] f32 sinusoidal embedding (dim must be even)."""
    half = dim // 2
    freqs = jnp.exp(-jnp.log(10000.0) * jnp.arange(half, dtype=jnp.float32) / half)
    args = t.astype(jnp.float32)[:, None] * freqs[None, :]
    return jnp.concatenate([jnp.sin(args), jnp.cos(args)], axis=-1)


class DiffusionDenoiser:
    """JAX equivalent of Model (MLP denoiser branch)."""

    def __init__(self, feat_dim, hidden_dim, t_emb_dim, key, *, tile_rows=256):
        assert t_emb_dim % 2 == 0, "t_emb_dim must be even for sin/cos embedding"
        self.feat_dim = feat_dim
        self.hidden_dim = hidden_dim
        self.t_emb_dim = t_emb_dim
        self.tile_rows = tile_rows
        din = 2 * feat_dim + t_emb_dim
        k1, k2, k3, k4, k5 = jax.random.split(key, 5)

        def init(k, fan_in, shape, dtype):
            return (jax.random.normal(k, shape, jnp.float32) / jnp.sqrt(fan_in)).astype(dtype)

        # First layer weight split over the (implicit) concat [y_t, enc_out, t_emb].
        self.w1y = init(k1, din, (feat_dim, hidden_dim), jnp.bfloat16)
        self.w1e = init(k2, din, (feat_dim, hidden_dim), jnp.bfloat16)
        self.w1t = init(k3, din, (t_emb_dim, hidden_dim), jnp.float32)  # wrapper-side
        self.b1 = jnp.zeros((1, hidden_dim), jnp.float32)
        self.w2 = init(k4, hidden_dim, (hidden_dim, hidden_dim), jnp.bfloat16)
        self.b2 = jnp.zeros((1, hidden_dim), jnp.float32)
        self.w3 = init(k5, hidden_dim, (hidden_dim, feat_dim), jnp.bfloat16)
        self.b3 = jnp.zeros((1, feat_dim), jnp.float32)

    def __call__(self, y_t, t, enc_out):
        """y_t: [B, L, D] f32, t: [B] int32, enc_out: [B, L, D] f32 -> [B, L, D]."""
        t_emb = timestep_embedding(t, self.t_emb_dim)             # [B, E]  (tiny)
        t_proj = (t_emb @ self.w1t + self.b1)[:, None, :]         # [B, 1, H]
        return fused_denoise_mlp(y_t, enc_out, t_proj,
                                 self.w1y, self.w1e, self.w2, self.b2,
                                 self.w3, self.b3, tile_rows=self.tile_rows)


def reference_forward(model, y_t, t, enc_out):
    """Pure-JAX reference replicating the kernel's bf16 operand rounding."""
    f32 = jnp.float32
    t_emb = timestep_embedding(t, model.t_emb_dim)
    t_proj = t_emb @ model.w1t + model.b1                         # [B, H]
    yb = y_t.astype(jnp.bfloat16).astype(f32)
    eb = enc_out.astype(jnp.bfloat16).astype(f32)
    h1 = yb @ model.w1y.astype(f32) + eb @ model.w1e.astype(f32) + t_proj[:, None, :]
    h1 = jax.nn.softplus(h1)
    h2 = jax.nn.softplus(h1.astype(jnp.bfloat16).astype(f32) @ model.w2.astype(f32)
                         + model.b2)
    out = h2.astype(jnp.bfloat16).astype(f32) @ model.w3.astype(f32) + model.b3
    return out


if __name__ == "__main__":
    # Shapes consistent with the time-series denoiser forward:
    #   y_t  : [B=2, L=512, D=8]   (noisy target window)
    #   t    : [B=2]               (diffusion timestep per sample)
    #   enc  : [B=2, L=512, D=8]   (encoder conditioning)
    B, L, D = 2, 512, 8
    HIDDEN, T_EMB = 128, 32
    NUM_TIMESTEPS = 100

    key = jax.random.PRNGKey(0)
    k_y, k_e, k_t, k_p = jax.random.split(key, 4)

    y_t = jax.random.normal(k_y, (B, L, D), jnp.float32)
    enc_out = jax.random.normal(k_e, (B, L, D), jnp.float32)
    t = jax.random.randint(k_t, (B,), 0, NUM_TIMESTEPS, jnp.int32)

    model = DiffusionDenoiser(feat_dim=D, hidden_dim=HIDDEN, t_emb_dim=T_EMB,
                              key=k_p, tile_rows=256)

    dec_out = model(y_t, t, enc_out)
    dec_out = jax.block_until_ready(dec_out)

    ref = reference_forward(model, y_t, t, enc_out)
    assert dec_out.shape == (B, L, D)
    assert jnp.allclose(dec_out, ref, atol=2e-3, rtol=2e-3), (
        float(jnp.max(jnp.abs(dec_out - ref))))

    print("KERNEL_OK")
</pallas_src>

<mosaic_0001>
module attributes {stable_mosaic.version = 11 : i64} {
  func.func @_denoise_mlp_kernel(%arg0: i32, %arg1: i32, %arg2: memref<1x256x8xf32, #tpu.memory_space<vmem>>, %arg3: memref<1x256x8xf32, #tpu.memory_space<vmem>>, %arg4: memref<1x1x128xf32, #tpu.memory_space<vmem>>, %arg5: memref<8x128xbf16, #tpu.memory_space<vmem>>, %arg6: memref<8x128xbf16, #tpu.memory_space<vmem>>, %arg7: memref<128x128xbf16, #tpu.memory_space<vmem>>, %arg8: memref<1x128xf32, #tpu.memory_space<vmem>>, %arg9: memref<128x8xbf16, #tpu.memory_space<vmem>>, %arg10: memref<1x8xf32, #tpu.memory_space<vmem>>, %arg11: memref<1x256x8xf32, #tpu.memory_space<vmem>>) attributes {dimension_semantics = [#tpu.dimension_semantics<parallel>, #tpu.dimension_semantics<parallel>], iteration_bounds = array<i64: 2, 2>, scalar_prefetch = 0 : i64, scratch_operands = 0 : i64, tpu.core_type = #tpu.core_type<tc>, window_params = [{transform_indices = @transform_0, window_bounds = array<i64: 1, 256, 8>}, {transform_indices = @transform_1, window_bounds = array<i64: 1, 256, 8>}, {transform_indices = @transform_2, window_bounds = array<i64: 1, 1, 128>}, {pipeline_mode = #tpu.pipeline_mode<synchronous>, transform_indices = @transform_3, window_bounds = array<i64: 8, 128>}, {pipeline_mode = #tpu.pipeline_mode<synchronous>, transform_indices = @transform_4, window_bounds = array<i64: 8, 128>}, {pipeline_mode = #tpu.pipeline_mode<synchronous>, transform_indices = @transform_5, window_bounds = array<i64: 128, 128>}, {pipeline_mode = #tpu.pipeline_mode<synchronous>, transform_indices = @transform_6, window_bounds = array<i64: 1, 128>}, {pipeline_mode = #tpu.pipeline_mode<synchronous>, transform_indices = @transform_7, window_bounds = array<i64: 128, 8>}, {pipeline_mode = #tpu.pipeline_mode<synchronous>, transform_indices = @transform_8, window_bounds = array<i64: 1, 8>}, {transform_indices = @transform_9, window_bounds = array<i64: 1, 256, 8>}]} {
    %c0 = arith.constant 0 : index
    %c0_0 = arith.constant 0 : index
    %c0_1 = arith.constant 0 : index
    %0 = vector.load %arg2[%c0, %c0_0, %c0_1] : memref<1x256x8xf32, #tpu.memory_space<vmem>>, vector<1x256x8xf32>
    %1 = vector.shape_cast %0 : vector<1x256x8xf32> to vector<256x8xf32>
    %2 = arith.truncf %1 : vector<256x8xf32> to vector<256x8xbf16>
    %c0_2 = arith.constant 0 : index
    %c0_3 = arith.constant 0 : index
    %c0_4 = arith.constant 0 : index
    %3 = vector.load %arg3[%c0_2, %c0_3, %c0_4] : memref<1x256x8xf32, #tpu.memory_space<vmem>>, vector<1x256x8xf32>
    %4 = vector.shape_cast %3 : vector<1x256x8xf32> to vector<256x8xf32>
    %5 = arith.truncf %4 : vector<256x8xf32> to vector<256x8xbf16>
    %c0_5 = arith.constant 0 : index
    %c0_6 = arith.constant 0 : index
    %6 = vector.load %arg5[%c0_5, %c0_6] : memref<8x128xbf16, #tpu.memory_space<vmem>>, vector<8x128xbf16>
    %cst = arith.constant dense<0.000000e+00> : vector<256x128xf32>
    %7 = tpu.matmul %2, %6, %cst {dimension_numbers = #tpu.dot_dimension_numbers<[1], [0], [0], [1], [0, 0, 1, 1], [], []>} : vector<256x8xbf16>, vector<8x128xbf16>, vector<256x128xf32> -> vector<256x128xf32>
    %c0_7 = arith.constant 0 : index
    %c0_8 = arith.constant 0 : index
    %8 = vector.load %arg6[%c0_7, %c0_8] : memref<8x128xbf16, #tpu.memory_space<vmem>>, vector<8x128xbf16>
    %cst_9 = arith.constant dense<0.000000e+00> : vector<256x128xf32>
    %9 = tpu.matmul %5, %8, %cst_9 {dimension_numbers = #tpu.dot_dimension_numbers<[1], [0], [0], [1], [0, 0, 1, 1], [], []>} : vector<256x8xbf16>, vector<8x128xbf16>, vector<256x128xf32> -> vector<256x128xf32>
    %10 = arith.addf %7, %9 : vector<256x128xf32>
    %c0_10 = arith.constant 0 : index
    %c0_11 = arith.constant 0 : index
    %c0_12 = arith.constant 0 : index
    %11 = vector.load %arg4[%c0_10, %c0_11, %c0_12] : memref<1x1x128xf32, #tpu.memory_space<vmem>>, vector<1x1x128xf32>
    %12 = vector.shape_cast %11 : vector<1x1x128xf32> to vector<1x128xf32>
    %13 = vector.broadcast %12 : vector<1x128xf32> to vector<256x128xf32>
    %14 = arith.addf %10, %13 : vector<256x128xf32>
    %cst_13 = arith.constant 0.000000e+00 : f32
    %15 = vector.broadcast %cst_13 : f32 to vector<256x128xf32>
    %16 = arith.maximumf %14, %15 : vector<256x128xf32>
    %17 = vector.broadcast %cst_13 : f32 to vector<256x128xf32>
    %18 = arith.subf %14, %17 : vector<256x128xf32>
    %19 = arith.cmpf one, %18, %18 : vector<256x128xf32>
    %20 = vector.broadcast %cst_13 : f32 to vector<256x128xf32>
    %21 = arith.addf %14, %20 : vector<256x128xf32>
    %22 = math.absf %18 : vector<256x128xf32>
    %cst_14 = arith.constant 0.000000e+00 : f32
    %23 = vector.broadcast %cst_14 : f32 to vector<256x128xf32>
    %24 = arith.subf %23, %22 : vector<256x128xf32>
    %25 = math.exp %24 : vector<256x128xf32>
    %26 = math.log1p %25 : vector<256x128xf32>
    %27 = arith.addf %16, %26 : vector<256x128xf32>
    %28 = arith.select %19, %21, %27 : vector<256x128xi1>, vector<256x128xf32>
    %29 = arith.truncf %28 : vector<256x128xf32> to vector<256x128xbf16>
    %c0_15 = arith.constant 0 : index
    %c0_16 = arith.constant 0 : index
    %30 = vector.load %arg7[%c0_15, %c0_16] : memref<128x128xbf16, #tpu.memory_space<vmem>>, vector<128x128xbf16>
    %cst_17 = arith.constant dense<0.000000e+00> : vector<256x128xf32>
    %31 = tpu.matmul %29, %30, %cst_17 {dimension_numbers = #tpu.dot_dimension_numbers<[1], [0], [0], [1], [0, 0, 1, 1], [], []>} : vector<256x128xbf16>, vector<128x128xbf16>, vector<256x128xf32> -> vector<256x128xf32>
    %c0_18 = arith.constant 0 : index
    %c0_19 = arith.constant 0 : index
    %32 = vector.load %arg8[%c0_18, %c0_19] : memref<1x128xf32, #tpu.memory_space<vmem>>, vector<1x128xf32>
    %33 = vector.broadcast %32 : vector<1x128xf32> to vector<256x128xf32>
    %34 = arith.addf %31, %33 : vector<256x128xf32>
    %cst_20 = arith.constant 0.000000e+00 : f32
    %35 = vector.broadcast %cst_20 : f32 to vector<256x128xf32>
    %36 = arith.maximumf %34, %35 : vector<256x128xf32>
    %37 = vector.broadcast %cst_20 : f32 to vector<256x128xf32>
    %38 = arith.subf %34, %37 : vector<256x128xf32>
    %39 = arith.cmpf one, %38, %38 : vector<256x128xf32>
    %40 = vector.broadcast %cst_20 : f32 to vector<256x128xf32>
    %41 = arith.addf %34, %40 : vector<256x128xf32>
    %42 = math.absf %38 : vector<256x128xf32>
    %cst_21 = arith.constant 0.000000e+00 : f32
    %43 = vector.broadcast %cst_21 : f32 to vector<256x128xf32>
    %44 = arith.subf %43, %42 : vector<256x128xf32>
    %45 = math.exp %44 : vector<256x128xf32>
    %46 = math.log1p %45 : vector<256x128xf32>
    %47 = arith.addf %36, %46 : vector<256x128xf32>
    %48 = arith.select %39, %41, %47 : vector<256x128xi1>, vector<256x128xf32>
    %49 = arith.truncf %48 : vector<256x128xf32> to vector<256x128xbf16>
    %c0_22 = arith.constant 0 : index
    %c0_23 = arith.constant 0 : index
    %50 = vector.load %arg9[%c0_22, %c0_23] : memref<128x8xbf16, #tpu.memory_space<vmem>>, vector<128x8xbf16>
    %cst_24 = arith.constant dense<0.000000e+00> : vector<256x8xf32>
    %51 = tpu.matmul %49, %50, %cst_24 {dimension_numbers = #tpu.dot_dimension_numbers<[1], [0], [0], [1], [0, 0, 1, 1], [], []>} : vector<256x128xbf16>, vector<128x8xbf16>, vector<256x8xf32> -> vector<256x8xf32>
    %c0_25 = arith.constant 0 : index
    %c0_26 = arith.constant 0 : index
    %52 = vector.load %arg10[%c0_25, %c0_26] : memref<1x8xf32, #tpu.memory_space<vmem>>, vector<1x8xf32>
    %53 = vector.broadcast %52 : vector<1x8xf32> to vector<256x8xf32>
    %54 = arith.addf %51, %53 : vector<256x8xf32>
    %c0_27 = arith.constant 0 : index
    %c0_28 = arith.constant 0 : index
    %c0_29 = arith.constant 0 : index
    %55 = vector.load %arg11[%c0_27, %c0_28, %c0_29] : memref<1x256x8xf32, #tpu.memory_space<vmem>>, vector<1x256x8xf32>
    %56 = vector.shape_cast %55 : vector<1x256x8xf32> to vector<256x8xf32>
    %57 = vector.shape_cast %54 : vector<256x8xf32> to vector<1x256x8xf32>
    tpu.vector_store %arg11[%c0_27, %c0_28, %c0_29], %57 {strides = array<i32>} : memref<1x256x8xf32, #tpu.memory_space<vmem>>, vector<1x256x8xf32>,
    return
  }
  func.func @transform_0(%arg0: i32, %arg1: i32) -> (i32, i32, i32) {
    %c0_i32 = arith.constant 0 : i32
    %c0_i32_0 = arith.constant 0 : i32
    return %arg0, %arg1, %c0_i32 : i32, i32, i32
  }
  func.func @transform_1(%arg0: i32, %arg1: i32) -> (i32, i32, i32) {
    %c0_i32 = arith.constant 0 : i32
    %c0_i32_0 = arith.constant 0 : i32
    return %arg0, %arg1, %c0_i32 : i32, i32, i32
  }
  func.func @transform_2(%arg0: i32, %arg1: i32) -> (i32, i32, i32) {
    %c0_i32 = arith.constant 0 : i32
    %c0_i32_0 = arith.constant 0 : i32
    %c0_i32_1 = arith.constant 0 : i32
    return %arg0, %c0_i32, %c0_i32_0 : i32, i32, i32
  }
  func.func @transform_3(%arg0: i32, %arg1: i32) -> (i32, i32) {
    %c0_i32 = arith.constant 0 : i32
    %c0_i32_0 = arith.constant 0 : i32
    %c0_i32_1 = arith.constant 0 : i32
    return %c0_i32, %c0_i32_0 : i32, i32
  }
  func.func @transform_4(%arg0: i32, %arg1: i32) -> (i32, i32) {
    %c0_i32 = arith.constant 0 : i32
    %c0_i32_0 = arith.constant 0 : i32
    %c0_i32_1 = arith.constant 0 : i32
    return %c0_i32, %c0_i32_0 : i32, i32
  }
  func.func @transform_5(%arg0: i32, %arg1: i32) -> (i32, i32) {
    %c0_i32 = arith.constant 0 : i32
    %c0_i32_0 = arith.constant 0 : i32
    %c0_i32_1 = arith.constant 0 : i32
    return %c0_i32, %c0_i32_0 : i32, i32
  }
  func.func @transform_6(%arg0: i32, %arg1: i32) -> (i32, i32) {
    %c0_i32 = arith.constant 0 : i32
    %c0_i32_0 = arith.constant 0 : i32
    %c0_i32_1 = arith.constant 0 : i32
    return %c0_i32, %c0_i32_0 : i32, i32
  }
  func.func @transform_7(%arg0: i32, %arg1: i32) -> (i32, i32) {
    %c0_i32 = arith.constant 0 : i32
    %c0_i32_0 = arith.constant 0 : i32
    %c0_i32_1 = arith.constant 0 : i32
    return %c0_i32, %c0_i32_0 : i32, i32
  }
  func.func @transform_8(%arg0: i32, %arg1: i32) -> (i32, i32) {
    %c0_i32 = arith.constant 0 : i32
    %c0_i32_0 = arith.constant 0 : i32
    %c0_i32_1 = arith.constant 0 : i32
    return %c0_i32, %c0_i32_0 : i32, i32
  }
  func.func @transform_9(%arg0: i32, %arg1: i32) -> (i32, i32, i32) {
    %c0_i32 = arith.constant 0 : i32
    %c0_i32_0 = arith.constant 0 : i32
    return %arg0, %arg1, %c0_i32 : i32, i32, i32
  }
}

</mosaic_0001>

<llo_original>
// kernel: tpu_custom_call.1
$region0: #{tpu_custom_call.1}
  #allocation0 [shape = 'u32[]', space=smem, size = 0x4, offset = 0x4, fixed_abs, tag = 'smem constant byte address 0x4 - core index']
  #allocation1 [shape = 'u32[144,128]{1,0:T(1,128)}', space=vmem, size = 0x12000, scoped, tag = 'internal scratch']
  %s0 = inlined_call_operand.vmem [shape: f32[2,512,8], index: 0, kind: input, shape index: {}]
  %s1 = inlined_call_operand.vmem [shape: f32[2,512,8], index: 1, kind: input, shape index: {}]
  %s2 = inlined_call_operand.vmem [shape: f32[2,1,128], index: 2, kind: input, shape index: {}]
  %s3 = inlined_call_operand.vmem [shape: bf16[8,128], index: 3, kind: input, shape index: {}]
  %s4 = inlined_call_operand.vmem [shape: bf16[8,128], index: 4, kind: input, shape index: {}]
  %s5 = inlined_call_operand.vmem [shape: bf16[128,128], index: 5, kind: input, shape index: {}]
  %s6 = inlined_call_operand.vmem [shape: f32[1,128], index: 6, kind: input, shape index: {}]
  %s7 = inlined_call_operand.vmem [shape: bf16[128,8], index: 7, kind: input, shape index: {}]
  %s8 = inlined_call_operand.vmem [shape: f32[1,8], index: 8, kind: input, shape index: {}]
  %s9 = inlined_call_operand.vmem [shape: f32[2,512,8], index: 9, kind: output, shape index: {}]
  %s10 = sld [smem:[#allocation0]]
  $region69: #{tpu_custom_call.1} parent=0
    _
  %s12 = ssub.s32 1, %s10
  %s13 = scalar_select 0, %s12, %s10
  loop: start=0, step=1, limit=6
  $region2: #{tpu_custom_call.1} parent=0 // loop_pre_header
    _
  $region3: #{tpu_custom_call.1} parent=0 // loop_header
    %s15 = sphi 0, %s19
    %p16 = scmp.ge.s32.totalorder %s15, 6
    %s22 = sphi 0, %s34
    %s23 = sphi 0, %s30
    %s24 = sphi 0, %s22
    %s25 = sphi 0, %s23
    %s26 = sphi 0, %s24
    %s27 = sphi 0, %s25
    %s39 = sphi 0, %s41
    %s42 = sphi 0, %s39
    %s43 = sphi 0, %s42
    %s59 = sphi 0, %s43
    %s67 = sphi 0, %s69
    %s70 = sphi 0, %s67
    %s71 = sphi 0, %s70
    %s87 = sphi 0, %s71
    %s93 = sphi 0, %s95
    %s96 = sphi 0, %s93
    %s97 = sphi 0, %s96
    %s113 = sphi 0, %s97
    %s117 = sphi 0, %s117
    %s119 = sphi 0, %s117
    %s120 = sphi 0, %s119
    %s134 = sphi 0, %s120
    %s138 = sphi 0, %s138
    %s140 = sphi 0, %s138
    %s141 = sphi 0, %s140
    %s155 = sphi 0, %s141
    %s159 = sphi 0, %s159
    %s161 = sphi 0, %s159
    %s162 = sphi 0, %s161
    %s176 = sphi 0, %s162
    %s180 = sphi 0, %s180
    %s182 = sphi 0, %s180
    %s183 = sphi 0, %s182
    %s197 = sphi 0, %s183
    %s201 = sphi 0, %s201
    %s203 = sphi 0, %s201
    %s204 = sphi 0, %s203
    %s218 = sphi 0, %s204
    %s222 = sphi 0, %s222
    %s224 = sphi 0, %s222
    %s225 = sphi 0, %s224
    %s239 = sphi 0, %s225
    %s247 = sphi 0, %s249
    %s250 = sphi 0, %s247
    %s251 = sphi 0, %s250
    %s267 = sphi 0, %s251
  $region4: #{tpu_custom_call.1} parent=0 // loop_header_branch
    %18 = sbr.rel (%p16) target = $region8
  $region5: #{tpu_custom_call.1} parent=0 // loop_body
    %s20 = ssub.s32 %s15, 1
    %s21 = ssub.s32 %s15, 2
    %s28 = sadd.s32 1, %s23
    %p29 = scmp.ge.s32.totalorder %s28, 2
    %s30 = scalar_select %p29, 0, %s28
    %s31 = sadd.s32 1, %s22
    %s32 = scalar_select %p29, %s31, %s22
    %p33 = scmp.ge.s32.totalorder %s32, 2
    %s34 = scalar_select %p33, 0, %s32
    %s35 = ssub.s32 %s22, %s34
    %s36 = ssub.s32 %s23, %s30
    %s37 = sor.u32 %s35, %s36
    %p38 = scmp.eq.s32.totalorder %s37, 0
    %s40 = sadd.s32 %s39, 1
    %s41 = scalar_select %p38, %s39, %s40
    %p44 = pneg %p38
    %p45 = scmp.eq.s32.totalorder %s15, 3
    %p46 = por %p44, %p45
    %p47 = scmp.ne.s32.totalorder %s39, %s42
    %p48 = scmp.eq.s32.totalorder %s15, 0
    %p49 = por %p47, %p48
    %p50 = scmp.ne.s32.totalorder %s39, %s42
    %p51 = scmp.eq.s32.totalorder %s20, 3
    %p52 = por %p50, %p51
    %p53 = scmp.ne.s32.totalorder %s42, %s43
    %p54 = scmp.eq.s32.totalorder %s20, 0
    %p55 = por %p53, %p54
    %p56 = scmp.ne.s32.totalorder %s42, %s43
    %p57 = scmp.eq.s32.totalorder %s21, 3
    %p58 = por %p56, %p57
    %p60 = scmp.ne.s32.totalorder %s43, %s59
    %p61 = scmp.eq.s32.totalorder %s21, 0
    %p62 = por %p60, %p61
    %s63 = ssub.s32 %s22, %s34
    %s64 = ssub.s32 %s23, %s30
    %s65 = sor.u32 %s63, %s64
    %p66 = scmp.eq.s32.totalorder %s65, 0
    %s68 = sadd.s32 %s67, 1
    %s69 = scalar_select %p66, %s67, %s68
    %p72 = pneg %p66
    %p73 = scmp.eq.s32.totalorder %s15, 3
    %p74 = por %p72, %p73
    %p75 = scmp.ne.s32.totalorder %s67, %s70
    %p76 = scmp.eq.s32.totalorder %s15, 0
    %p77 = por %p75, %p76
    %p78 = scmp.ne.s32.totalorder %s67, %s70
    %p79 = scmp.eq.s32.totalorder %s20, 3
    %p80 = por %p78, %p79
    %p81 = scmp.ne.s32.totalorder %s70, %s71
    %p82 = scmp.eq.s32.totalorder %s20, 0
    %p83 = por %p81, %p82
    %p84 = scmp.ne.s32.totalorder %s70, %s71
    %p85 = scmp.eq.s32.totalorder %s21, 3
    %p86 = por %p84, %p85
    %p88 = scmp.ne.s32.totalorder %s71, %s87
    %p89 = scmp.eq.s32.totalorder %s21, 0
    %p90 = por %p88, %p89
    %s91 = ssub.s32 %s22, %s34
    %p92 = scmp.eq.s32.totalorder %s91, 0
    %s94 = sadd.s32 %s93, 1
    %s95 = scalar_select %p92, %s93, %s94
    %p98 = pneg %p92
    %p99 = scmp.eq.s32.totalorder %s15, 3
    %p100 = por %p98, %p99
    %p101 = scmp.ne.s32.totalorder %s93, %s96
    %p102 = scmp.eq.s32.totalorder %s15, 0
    %p103 = por %p101, %p102
    %p104 = scmp.ne.s32.totalorder %s93, %s96
    %p105 = scmp.eq.s32.totalorder %s20, 3
    %p106 = por %p104, %p105
    %p107 = scmp.ne.s32.totalorder %s96, %s97
    %p108 = scmp.eq.s32.totalorder %s20, 0
    %p109 = por %p107, %p108
    %p110 = scmp.ne.s32.totalorder %s96, %s97
    %p111 = scmp.eq.s32.totalorder %s21, 3
    %p112 = por %p110, %p111
    %p114 = scmp.ne.s32.totalorder %s97, %s113
    %p115 = scmp.eq.s32.totalorder %s21, 0
    %p116 = por %p114, %p115
    %s118 = sadd.s32 %s117, 1
    %p121 = scmp.eq.s32.totalorder %s15, 3
    %p122 = scmp.ne.s32.totalorder %s117, %s119
    %p123 = scmp.eq.s32.totalorder %s15, 0
    %p124 = por %p122, %p123
    %p125 = scmp.ne.s32.totalorder %s117, %s119
    %p126 = scmp.eq.s32.totalorder %s20, 3
    %p127 = por %p125, %p126
    %p128 = scmp.ne.s32.totalorder %s119, %s120
    %p129 = scmp.eq.s32.totalorder %s20, 0
    %p130 = por %p128, %p129
    %p131 = scmp.ne.s32.totalorder %s119, %s120
    %p132 = scmp.eq.s32.totalorder %s21, 3
    %p133 = por %p131, %p132
    %p135 = scmp.ne.s32.totalorder %s120, %s134
    %p136 = scmp.eq.s32.totalorder %s21, 0
    %p137 = por %p135, %p136
    %s139 = sadd.s32 %s138, 1
    %p142 = scmp.eq.s32.totalorder %s15, 3
    %p143 = scmp.ne.s32.totalorder %s138, %s140
    %p144 = scmp.eq.s32.totalorder %s15, 0
    %p145 = por %p143, %p144
    %p146 = scmp.ne.s32.totalorder %s138, %s140
    %p147 = scmp.eq.s32.totalorder %s20, 3
    %p148 = por %p146, %p147
    %p149 = scmp.ne.s32.totalorder %s140, %s141
    %p150 = scmp.eq.s32.totalorder %s20, 0
    %p151 = por %p149, %p150
    %p152 = scmp.ne.s32.totalorder %s140, %s141
    %p153 = scmp.eq.s32.totalorder %s21, 3
    %p154 = por %p152, %p153
    %p156 = scmp.ne.s32.totalorder %s141, %s155
    %p157 = scmp.eq.s32.totalorder %s21, 0
    %p158 = por %p156, %p157
    %s160 = sadd.s32 %s159, 1
    %p163 = scmp.eq.s32.totalorder %s15, 3
    %p164 = scmp.ne.s32.totalorder %s159, %s161
    %p165 = scmp.eq.s32.totalorder %s15, 0
    %p166 = por %p164, %p165
    %p167 = scmp.ne.s32.totalorder %s159, %s161
    %p168 = scmp.eq.s32.totalorder %s20, 3
    %p169 = por %p167, %p168
    %p170 = scmp.ne.s32.totalorder %s161, %s162
    %p171 = scmp.eq.s32.totalorder %s20, 0
    %p172 = por %p170, %p171
    %p173 = scmp.ne.s32.totalorder %s161, %s162
    %p174 = scmp.eq.s32.totalorder %s21, 3
    %p175 = por %p173, %p174
    %p177 = scmp.ne.s32.totalorder %s162, %s176
    %p178 = scmp.eq.s32.totalorder %s21, 0
    %p179 = por %p177, %p178
    %s181 = sadd.s32 %s180, 1
    %p184 = scmp.eq.s32.totalorder %s15, 3
    %p185 = scmp.ne.s32.totalorder %s180, %s182
    %p186 = scmp.eq.s32.totalorder %s15, 0
    %p187 = por %p185, %p186
    %p188 = scmp.ne.s32.totalorder %s180, %s182
    %p189 = scmp.eq.s32.totalorder %s20, 3
    %p190 = por %p188, %p189
    %p191 = scmp.ne.s32.totalorder %s182, %s183
    %p192 = scmp.eq.s32.totalorder %s20, 0
    %p193 = por %p191, %p192
    %p194 = scmp.ne.s32.totalorder %s182, %s183
    %p195 = scmp.eq.s32.totalorder %s21, 3
    %p196 = por %p194, %p195
    %p198 = scmp.ne.s32.totalorder %s183, %s197
    %p199 = scmp.eq.s32.totalorder %s21, 0
    %p200 = por %p198, %p199
    %s202 = sadd.s32 %s201, 1
    %p205 = scmp.eq.s32.totalorder %s15, 3
    %p206 = scmp.ne.s32.totalorder %s201, %s203
    %p207 = scmp.eq.s32.totalorder %s15, 0
    %p208 = por %p206, %p207
    %p209 = scmp.ne.s32.totalorder %s201, %s203
    %p210 = scmp.eq.s32.totalorder %s20, 3
    %p211 = por %p209, %p210
    %p212 = scmp.ne.s32.totalorder %s203, %s204
    %p213 = scmp.eq.s32.totalorder %s20, 0
    %p214 = por %p212, %p213
    %p215 = scmp.ne.s32.totalorder %s203, %s204
    %p216 = scmp.eq.s32.totalorder %s21, 3
    %p217 = por %p215, %p216
    %p219 = scmp.ne.s32.totalorder %s204, %s218
    %p220 = scmp.eq.s32.totalorder %s21, 0
    %p221 = por %p219, %p220
    %s223 = sadd.s32 %s222, 1
    %p226 = scmp.eq.s32.totalorder %s15, 3
    %p227 = scmp.ne.s32.totalorder %s222, %s224
    %p228 = scmp.eq.s32.totalorder %s15, 0
    %p229 = por %p227, %p228
    %p230 = scmp.ne.s32.totalorder %s222, %s224
    %p231 = scmp.eq.s32.totalorder %s20, 3
    %p232 = por %p230, %p231
    %p233 = scmp.ne.s32.totalorder %s224, %s225
    %p234 = scmp.eq.s32.totalorder %s20, 0
    %p235 = por %p233, %p234
    %p236 = scmp.ne.s32.totalorder %s224, %s225
    %p237 = scmp.eq.s32.totalorder %s21, 3
    %p238 = por %p236, %p237
    %p240 = scmp.ne.s32.totalorder %s225, %s239
    %p241 = scmp.eq.s32.totalorder %s21, 0
    %p242 = por %p240, %p241
    %s243 = ssub.s32 %s22, %s34
    %s244 = ssub.s32 %s23, %s30
    %s245 = sor.u32 %s243, %s244
    %p246 = scmp.eq.s32.totalorder %s245, 0
    %s248 = sadd.s32 %s247, 1
    %s249 = scalar_select %p246, %s247, %s248
    %p252 = pneg %p246
    %p253 = scmp.eq.s32.totalorder %s15, 3
    %p254 = por %p252, %p253
    %p255 = scmp.ne.s32.totalorder %s247, %s250
    %p256 = scmp.eq.s32.totalorder %s15, 0
    %p257 = por %p255, %p256
    %p258 = scmp.ne.s32.totalorder %s247, %s250
    %p259 = scmp.eq.s32.totalorder %s20, 3
    %p260 = por %p258, %p259
    %p261 = scmp.ne.s32.totalorder %s250, %s251
    %p262 = scmp.eq.s32.totalorder %s20, 0
    %p263 = por %p261, %p262
    %p264 = scmp.ne.s32.totalorder %s250, %s251
    %p265 = scmp.eq.s32.totalorder %s21, 3
    %p266 = por %p264, %p265
    %p268 = scmp.ne.s32.totalorder %s251, %s267
    %p269 = scmp.eq.s32.totalorder %s21, 0
    %p270 = por %p268, %p269
    %p271 = scmp.le.s32.totalorder 1, %s15
    %p272 = scmp.lt.s32.totalorder %s15, 5
    %p273 = pnand %p271, %p272
    %p274 = pneg %p273
    // Predicated region
    $region9: #{tpu_custom_call.1} parent=5 // pred_check
      _
    $region10: #{tpu_custom_call.1} parent=5 // pred_check_branch
      %276 = sbr.rel (%p273) target = $region12
    $region11: #{tpu_custom_call.1} parent=5 // pred_region
      %s277 = ssub.s32 %s15, 1
      // Predicated region
      $region13: #{tpu_custom_call.1} parent=11 // pred_check
        %p278 = pneg %p130
      $region14: #{tpu_custom_call.1} parent=11 // pred_check_branch
        %280 = sbr.rel (%p278) target = $region16
      $region15: #{tpu_custom_call.1} parent=11 // pred_region
        _
      $region16: #{tpu_custom_call.1} parent=11 // pred_fallthru
        _
      // Predicated region
      $region17: #{tpu_custom_call.1} parent=11 // pred_check
        %p281 = pneg %p151
      $region18: #{tpu_custom_call.1} parent=11 // pred_check_branch
        %283 = sbr.rel (%p281) target = $region20
      $region19: #{tpu_custom_call.1} parent=11 // pred_region
        _
      $region20: #{tpu_custom_call.1} parent=11 // pred_fallthru
        _
      // Predicated region
      $region21: #{tpu_custom_call.1} parent=11 // pred_check
        %p284 = pneg %p172
      $region22: #{tpu_custom_call.1} parent=11 // pred_check_branch
        %286 = sbr.rel (%p284) target = $region24
      $region23: #{tpu_custom_call.1} parent=11 // pred_region
        _
      $region24: #{tpu_custom_call.1} parent=11 // pred_fallthru
        _
      // Predicated region
      $region25: #{tpu_custom_call.1} parent=11 // pred_check
        %p287 = pneg %p193
      $region26: #{tpu_custom_call.1} parent=11 // pred_check_branch
        %289 = sbr.rel (%p287) target = $region28
      $region27: #{tpu_custom_call.1} parent=11 // pred_region
        _
      $region28: #{tpu_custom_call.1} parent=11 // pred_fallthru
        _
      // Predicated region
      $region29: #{tpu_custom_call.1} parent=11 // pred_check
        %p290 = pneg %p214
      $region30: #{tpu_custom_call.1} parent=11 // pred_check_branch
        %292 = sbr.rel (%p290) target = $region32
      $region31: #{tpu_custom_call.1} parent=11 // pred_region
        _
      $region32: #{tpu_custom_call.1} parent=11 // pred_fallthru
        _
      // Predicated region
      $region33: #{tpu_custom_call.1} parent=11 // pred_check
        %p293 = pneg %p235
      $region34: #{tpu_custom_call.1} parent=11 // pred_check_branch
        %295 = sbr.rel (%p293) target = $region36
      $region35: #{tpu_custom_call.1} parent=11 // pred_region
        _
      $region36: #{tpu_custom_call.1} parent=11 // pred_fallthru
        _
    $region12: #{tpu_custom_call.1} parent=5 // pred_fallthru
      _
    %p296 = scmp.lt.s32.totalorder %s15, 4
    // Predicated region
    $region37: #{tpu_custom_call.1} parent=5 // pred_check
      %p297 = pneg %p296
    $region38: #{tpu_custom_call.1} parent=5 // pred_check_branch
      %299 = sbr.rel (%p297) target = $region40
    $region39: #{tpu_custom_call.1} parent=5 // pred_region
      // Predicated region
      $region41: #{tpu_custom_call.1} parent=39 // pred_check
        %p300 = pneg %p49
      $region42: #{tpu_custom_call.1} parent=39 // pred_check_branch
        %302 = sbr.rel (%p300) target = $region44
      $region43: #{tpu_custom_call.1} parent=39 // pred_region
        %s303 = smul.u32 32, %s23
        %p304 = scmp.lt.s32.totalorder %s22, 1
        %s305 = scalar_select %p304, %s22, 1
        %p306 = scmp.lt.s32.totalorder %s303, 63
        %s307 = scalar_select %p306, %s303, 63
        %s308 = smul.addr %s305, 64
        %s309 = sadd.s32 %s307, %s308
        %s310 = smul.addr %s309, 8
        %s311 = scalar_lea.vmem %s0, %s310
        %s312 = smul.u32 32, %s23
      $region44: #{tpu_custom_call.1} parent=39 // pred_fallthru
        _
      // Predicated region
      $region45: #{tpu_custom_call.1} parent=39 // pred_check
        %p313 = pneg %p77
      $region46: #{tpu_custom_call.1} parent=39 // pred_check_branch
        %315 = sbr.rel (%p313) target = $region48
      $region47: #{tpu_custom_call.1} parent=39 // pred_region
        %s316 = smul.u32 32, %s23
        %p317 = scmp.lt.s32.totalorder %s22, 1
        %s318 = scalar_select %p317, %s22, 1
        %p319 = scmp.lt.s32.totalorder %s316, 63
        %s320 = scalar_select %p319, %s316, 63
        %s321 = smul.addr %s318, 64
        %s322 = sadd.s32 %s320, %s321
        %s323 = smul.addr %s322, 8
        %s324 = scalar_lea.vmem %s1, %s323
        %s325 = smul.u32 32, %s23
      $region48: #{tpu_custom_call.1} parent=39 // pred_fallthru
        _
      // Predicated region
      $region49: #{tpu_custom_call.1} parent=39 // pred_check
        %p326 = pneg %p103
      $region50: #{tpu_custom_call.1} parent=39 // pred_check_branch
        %328 = sbr.rel (%p326) target = $region52
      $region51: #{tpu_custom_call.1} parent=39 // pred_region
        %p329 = scmp.lt.s32.totalorder %s22, 1
        %s330 = scalar_select %p329, %s22, 1
        %s331 = scalar_lea.vmem %s2, %s330
      $region52: #{tpu_custom_call.1} parent=39 // pred_fallthru
        _
    $region40: #{tpu_custom_call.1} parent=5 // pred_fallthru
      _
    %p332 = scmp.le.s32.totalorder 1, %s15
    %p333 = scmp.lt.s32.totalorder %s15, 5
    %p334 = pnand %p332, %p333
    %p335 = pneg %p334
    // Predicated region
    $region53: #{tpu_custom_call.1} parent=5 // pred_check
      _
    $region54: #{tpu_custom_call.1} parent=5 // pred_check_branch
      %337 = sbr.rel (%p334) target = $region56
    $region55: #{tpu_custom_call.1} parent=5 // pred_region
      %s338 = ssub.s32 %s15, 1
      %s339 = smul.u32 32, %s25
      %p340 = scmp.lt.s32.totalorder %s24, 1
      %s341 = scalar_select %p340, %s24, 1
      %p342 = scmp.lt.s32.totalorder %s339, 63
      %s343 = scalar_select %p342, %s339, 63
      %s344 = smul.addr %s341, 64
      %s345 = sadd.s32 %s343, %s344
      %s346 = smul.addr %s345, 8
      %s347 = scalar_lea.vmem %s0, %s346
      %p348 = pneg %p55
      %p349 = pneg %p52
      %s350 = smul.u32 32, %s25
      %p351 = scmp.lt.s32.totalorder %s24, 1
      %s352 = scalar_select %p351, %s24, 1
      %p353 = scmp.lt.s32.totalorder %s350, 63
      %s354 = scalar_select %p353, %s350, 63
      %s355 = smul.addr %s352, 64
      %s356 = sadd.s32 %s354, %s355
      %s357 = smul.addr %s356, 8
      %s358 = scalar_lea.vmem %s1, %s357
      %p359 = pneg %p83
      %p360 = pneg %p80
      %p361 = scmp.lt.s32.totalorder %s24, 1
      %s362 = scalar_select %p361, %s24, 1
      %s363 = scalar_lea.vmem %s2, %s362
      %p364 = pneg %p109
      %p365 = pneg %p106
      %p366 = pneg %p130
      %p367 = pneg %p127
      %p368 = pneg %p151
      %p369 = pneg %p148
      %p370 = pneg %p172
      %p371 = pneg %p169
      %p372 = pneg %p193
      %p373 = pneg %p190
      %p374 = pneg %p214
      %p375 = pneg %p211
      %p376 = pneg %p235
      %p377 = pneg %p232
      %p378 = pneg %p263
      %p379 = pneg %p260
      %s380 = smul.u32 32, %s25
      %p381 = scmp.lt.s32.totalorder %s24, 1
      %s382 = scalar_select %p381, %s24, 1
      %p383 = scmp.lt.s32.totalorder %s380, 63
      %s384 = scalar_select %p383, %s380, 63
      %s385 = smul.addr %s382, 64
      %s386 = sadd.s32 %s384, %s385
      %s387 = smul.addr %s386, 8
      %s388 = scalar_lea.vmem %s9, %s387
      %s389 = smul.u32 32, %s25
      %p390 = scmp.lt.s32.totalorder %s24, 1
      %s391 = scalar_select %p390, %s24, 1
      %p392 = scmp.lt.s32.totalorder %s389, 63
      %s393 = scalar_select %p392, %s389, 63
      %s394 = smul.addr %s391, 64
      %s395 = sadd.s32 %s393, %s394
      %s396 = smul.addr %s395, 8
      %s397 = scalar_lea.vmem %s0, %s396
      %s398 = smul.u32 32, %s25
      %s399 = smul.u32 32, %s25
      %p400 = scmp.lt.s32.totalorder %s24, 1
      %s401 = scalar_select %p400, %s24, 1
      %p402 = scmp.lt.s32.totalorder %s399, 63
      %s403 = scalar_select %p402, %s399, 63
      %s404 = smul.addr %s401, 64
      %s405 = sadd.s32 %s403, %s404
      %s406 = smul.addr %s405, 8
      %s407 = scalar_lea.vmem %s1, %s406
      %s408 = smul.u32 32, %s25
      %p409 = scmp.lt.s32.totalorder %s24, 1
      %s410 = scalar_select %p409, %s24, 1
      %s411 = scalar_lea.vmem %s2, %s410
      %s412 = smul.u32 32, %s25
      %p413 = scmp.lt.s32.totalorder %s24, 1
      %s414 = scalar_select %p413, %s24, 1
      %p415 = scmp.lt.s32.totalorder %s412, 63
      %s416 = scalar_select %p415, %s412, 63
      %s417 = smul.addr %s414, 64
      %s418 = sadd.s32 %s416, %s417
      %s419 = smul.addr %s418, 8
      %s420 = scalar_lea.vmem %s9, %s419
      %s421 = smul.u32 32, %s25
      %v423 = vld [vmem:[%s397] sm:$0xff]
      %v424 = vld [vmem:[%s397 + $0x8] sm:$0xff]
      %v425 = vld [vmem:[%s397 + $0x10] sm:$0xff]
      %v426 = vld [vmem:[%s397 + $0x18] sm:$0xff]
      %v427 = vld [vmem:[%s397 + $0x20] sm:$0xff]
      %v428 = vld [vmem:[%s397 + $0x28] sm:$0xff]
      %v429 = vld [vmem:[%s397 + $0x30] sm:$0xff]
      %v430 = vld [vmem:[%s397 + $0x38] sm:$0xff]
      %v431 = vld [vmem:[%s397 + $0x40] sm:$0xff]
      %v432 = vld [vmem:[%s397 + $0x48] sm:$0xff]
      %v433 = vld [vmem:[%s397 + $0x50] sm:$0xff]
      %v434 = vld [vmem:[%s397 + $0x58] sm:$0xff]
      %v435 = vld [vmem:[%s397 + $0x60] sm:$0xff]
      %v436 = vld [vmem:[%s397 + $0x68] sm:$0xff]
      %v437 = vld [vmem:[%s397 + $0x70] sm:$0xff]
      %v438 = vld [vmem:[%s397 + $0x78] sm:$0xff]
      %v439 = vld [vmem:[%s397 + $0x80] sm:$0xff]
      %v440 = vld [vmem:[%s397 + $0x88] sm:$0xff]
      %v441 = vld [vmem:[%s397 + $0x90] sm:$0xff]
      %v442 = vld [vmem:[%s397 + $0x98] sm:$0xff]
      %v443 = vld [vmem:[%s397 + $0xa0] sm:$0xff]
      %v444 = vld [vmem:[%s397 + $0xa8] sm:$0xff]
      %v445 = vld [vmem:[%s397 + $0xb0] sm:$0xff]
      %v446 = vld [vmem:[%s397 + $0xb8] sm:$0xff]
      %v447 = vld [vmem:[%s397 + $0xc0] sm:$0xff]
      %v448 = vld [vmem:[%s397 + $0xc8] sm:$0xff]
      %v449 = vld [vmem:[%s397 + $0xd0] sm:$0xff]
      %v450 = vld [vmem:[%s397 + $0xd8] sm:$0xff]
      %v451 = vld [vmem:[%s397 + $0xe0] sm:$0xff]
      %v452 = vld [vmem:[%s397 + $0xe8] sm:$0xff]
      %v453 = vld [vmem:[%s397 + $0xf0] sm:$0xff]
      %v454 = vld [vmem:[%s397 + $0xf8] sm:$0xff]
      %v455 = vpack.c.bf16 %v424, %v423
      %v456 = vpack.c.bf16 %v426, %v425
      %v457 = vpack.c.bf16 %v428, %v427
      %v458 = vpack.c.bf16 %v430, %v429
      %v459 = vpack.c.bf16 %v432, %v431
      %v460 = vpack.c.bf16 %v434, %v433
      %v461 = vpack.c.bf16 %v436, %v435
      %v462 = vpack.c.bf16 %v438, %v437
      %v463 = vpack.c.bf16 %v440, %v439
      %v464 = vpack.c.bf16 %v442, %v441
      %v465 = vpack.c.bf16 %v444, %v443
      %v466 = vpack.c.bf16 %v446, %v445
      %v467 = vpack.c.bf16 %v448, %v447
      %v468 = vpack.c.bf16 %v450, %v449
      %v469 = vpack.c.bf16 %v452, %v451
      %v470 = vpack.c.bf16 %v454, %v453
      %v471 = vld [vmem:[%s407] sm:$0xff]
      %v472 = vld [vmem:[%s407 + $0x8] sm:$0xff]
      %v473 = vld [vmem:[%s407 + $0x10] sm:$0xff]
      %v474 = vld [vmem:[%s407 + $0x18] sm:$0xff]
      %v475 = vld [vmem:[%s407 + $0x20] sm:$0xff]
      %v476 = vld [vmem:[%s407 + $0x28] sm:$0xff]
      %v477 = vld [vmem:[%s407 + $0x30] sm:$0xff]
      %v478 = vld [vmem:[%s407 + $0x38] sm:$0xff]
      %v479 = vld [vmem:[%s407 + $0x40] sm:$0xff]
      %v480 = vld [vmem:[%s407 + $0x48] sm:$0xff]
      %v481 = vld [vmem:[%s407 + $0x50] sm:$0xff]
      %v482 = vld [vmem:[%s407 + $0x58] sm:$0xff]
      %v483 = vld [vmem:[%s407 + $0x60] sm:$0xff]
      %v484 = vld [vmem:[%s407 + $0x68] sm:$0xff]
      %v485 = vld [vmem:[%s407 + $0x70] sm:$0xff]
      %v486 = vld [vmem:[%s407 + $0x78] sm:$0xff]
      %v487 = vld [vmem:[%s407 + $0x80] sm:$0xff]
      %v488 = vld [vmem:[%s407 + $0x88] sm:$0xff]
      %v489 = vld [vmem:[%s407 + $0x90] sm:$0xff]
      %v490 = vld [vmem:[%s407 + $0x98] sm:$0xff]
      %v491 = vld [vmem:[%s407 + $0xa0] sm:$0xff]
      %v492 = vld [vmem:[%s407 + $0xa8] sm:$0xff]
      %v493 = vld [vmem:[%s407 + $0xb0] sm:$0xff]
      %v494 = vld [vmem:[%s407 + $0xb8] sm:$0xff]
      %v495 = vld [vmem:[%s407 + $0xc0] sm:$0xff]
      %v496 = vld [vmem:[%s407 + $0xc8] sm:$0xff]
      %v497 = vld [vmem:[%s407 + $0xd0] sm:$0xff]
      %v498 = vld [vmem:[%s407 + $0xd8] sm:$0xff]
      %v499 = vld [vmem:[%s407 + $0xe0] sm:$0xff]
      %v500 = vld [vmem:[%s407 + $0xe8] sm:$0xff]
      %v501 = vld [vmem:[%s407 + $0xf0] sm:$0xff]
      %v502 = vld [vmem:[%s407 + $0xf8] sm:$0xff]
      %v503 = vpack.c.bf16 %v472, %v471
      %v504 = vpack.c.bf16 %v474, %v473
      %v505 = vpack.c.bf16 %v476, %v475
      %v506 = vpack.c.bf16 %v478, %v477
      %v507 = vpack.c.bf16 %v480, %v479
      %v508 = vpack.c.bf16 %v482, %v481
      %v509 = vpack.c.bf16 %v484, %v483
      %v510 = vpack.c.bf16 %v486, %v485
      %v511 = vpack.c.bf16 %v488, %v487
      %v512 = vpack.c.bf16 %v490, %v489
      %v513 = vpack.c.bf16 %v492, %v491
      %v514 = vpack.c.bf16 %v494, %v493
      %v515 = vpack.c.bf16 %v496, %v495
      %v516 = vpack.c.bf16 %v498, %v497
      %v517 = vpack.c.bf16 %v500, %v499
      %v518 = vpack.c.bf16 %v502, %v501
      %v519 = vld [vmem:[%s3] sm:$0xf]
      %v520 = vld [vmem:[%s4] sm:$0xf]
      %vm521 = vcmask 64512
      %v523 = vsel %vm521, %v503, 0
      %v526 = vsel %vm521, %v504, 0
      %v529 = vsel %vm521, %v505, 0
      %v532 = vsel %vm521, %v506, 0
      %v535 = vsel %vm521, %v507, 0
      %v538 = vsel %vm521, %v508, 0
      %v541 = vsel %vm521, %v509, 0
      %v544 = vsel %vm521, %v510, 0
      %v547 = vsel %vm521, %v511, 0
      %v550 = vsel %vm521, %v512, 0
      %v553 = vsel %vm521, %v513, 0
      %v556 = vsel %vm521, %v514, 0
      %v559 = vsel %vm521, %v515, 0
      %v562 = vsel %vm521, %v516, 0
      %v565 = vsel %vm521, %v517, 0
      %v568 = vsel %vm521, %v518, 0
      %vm570 = vcmask 1043456
      %v572 = vsel %vm570, %v520, 0
      %574 = vmatprep.subr.bf16.mxu0 0
      %575 = vmatpush1.bf16.msra.mxu0 %v572
      %576 = vmatprep.subr.bf16.mxu0 0
      %577 = vmatpush1.bf16.msra.mxu0 0
      %578 = vmatprep.subr.bf16.mxu0 0
      %579 = vmatpush1.bf16.msra.mxu0 0
      %580 = vmatprep.subr.bf16.mxu0 0
      %581 = vmatpush1.bf16.msra.mxu0 0
      %582 = vmatprep.subr.bf16.mxu0 0
      %583 = vmatpush1.bf16.msra.mxu0 0
      %584 = vmatprep.subr.bf16.mxu0 0
      %585 = vmatpush1.bf16.msra.mxu0 0
      %586 = vmatprep.subr.bf16.mxu0 0
      %587 = vmatpush1.bf16.msra.mxu0 0
      %588 = vmatprep.subr.bf16.mxu0 0
      %589 = vmatpush1.bf16.msra.mxu0 0
      %590 = vmatprep.subr.bf16.mxu0 0
      %591 = vmatpush1.bf16.msra.mxu0 0
      %592 = vmatprep.subr.bf16.mxu0 0
      %593 = vmatpush1.bf16.msra.mxu0 0
      %594 = vmatprep.subr.bf16.mxu0 0
      %595 = vmatpush1.bf16.msra.mxu0 0
      %596 = vmatprep.subr.bf16.mxu0 0
      %597 = vmatpush1.bf16.msra.mxu0 0
      %598 = vmatprep.subr.bf16.mxu0 0
      %599 = vmatpush1.bf16.msra.mxu0 0
      %600 = vmatprep.subr.bf16.mxu0 0
      %601 = vmatpush1.bf16.msra.mxu0 0
      %602 = vmatprep.subr.bf16.mxu0 0
      %603 = vmatpush1.bf16.msra.mxu0 0
      %604 = vmatprep.subr.bf16.mxu0 0
      %605 = vmatpush1.bf16.msra.mxu0 0
      %606 = vmatprep.mubr.bf16.mxu0 0
      %607 = vmatmul.mubr.bf16.gmra.mrb[0].mxu0 %v523
      %v608 = vpop.f32.mrb[0].mxu0
      %v609 = vadd.f32 0.0, %v608
      %v610 = vpop.f32.mrb[0].mxu0
      %v611 = vpop.f32.mrb[0].mxu0
      %v612 = vadd.f32 0.0, %v611
      %v613 = vpop.f32.mrb[0].mxu0
      %614 = vmatprep.mubr.bf16.mxu0 0
      %615 = vmatmul.mubr.bf16.gmra.mrb[0].mxu0 %v526
      %v616 = vpop.f32.mrb[0].mxu0
      %v617 = vadd.f32 0.0, %v616
      %v618 = vpop.f32.mrb[0].mxu0
      %v619 = vpop.f32.mrb[0].mxu0
      %v620 = vadd.f32 0.0, %v619
      %v621 = vpop.f32.mrb[0].mxu0
      %622 = vmatprep.mubr.bf16.mxu0 0
      %623 = vmatmul.mubr.bf16.gmra.mrb[0].mxu0 %v529
      %v624 = vpop.f32.mrb[0].mxu0
      %v625 = vadd.f32 0.0, %v624
      %v626 = vpop.f32.mrb[0].mxu0
      %v627 = vpop.f32.mrb[0].mxu0
      %v628 = vadd.f32 0.0, %v627
      %v629 = vpop.f32.mrb[0].mxu0
      %630 = vmatprep.mubr.bf16.mxu0 0
      %631 = vmatmul.mubr.bf16.gmra.mrb[0].mxu0 %v532
      %v632 = vpop.f32.mrb[0].mxu0
      %v633 = vadd.f32 0.0, %v632
      %v634 = vpop.f32.mrb[0].mxu0
      %v635 = vpop.f32.mrb[0].mxu0
      %v636 = vadd.f32 0.0, %v635
      %v637 = vpop.f32.mrb[0].mxu0
      %638 = vmatprep.mubr.bf16.mxu0 0
      %639 = vmatmul.mubr.bf16.gmra.mrb[0].mxu0 %v535
      %v640 = vpop.f32.mrb[0].mxu0
      %v641 = vadd.f32 0.0, %v640
      %v642 = vpop.f32.mrb[0].mxu0
      %v643 = vpop.f32.mrb[0].mxu0
      %v644 = vadd.f32 0.0, %v643
      %v645 = vpop.f32.mrb[0].mxu0
      %646 = vmatprep.mubr.bf16.mxu0 0
      %647 = vmatmul.mubr.bf16.gmra.mrb[0].mxu0 %v538
      %v648 = vpop.f32.mrb[0].mxu0
      %v649 = vadd.f32 0.0, %v648
      %v650 = vpop.f32.mrb[0].mxu0
      %v651 = vpop.f32.mrb[0].mxu0
      %v652 = vadd.f32 0.0, %v651
      %v653 = vpop.f32.mrb[0].mxu0
      %654 = vmatprep.mubr.bf16.mxu0 0
      %655 = vmatmul.mubr.bf16.gmra.mrb[0].mxu0 %v541
      %v656 = vpop.f32.mrb[0].mxu0
      %v657 = vadd.f32 0.0, %v656
      %v658 = vpop.f32.mrb[0].mxu0
      %v659 = vpop.f32.mrb[0].mxu0
      %v660 = vadd.f32 0.0, %v659
      %v661 = vpop.f32.mrb[0].mxu0
      %662 = vmatprep.mubr.bf16.mxu0 0
      %663 = vmatmul.mubr.bf16.gmra.mrb[0].mxu0 %v544
      %v664 = vpop.f32.mrb[0].mxu0
      %v665 = vadd.f32 0.0, %v664
      %v666 = vpop.f32.mrb[0].mxu0
      %v667 = vpop.f32.mrb[0].mxu0
      %v668 = vadd.f32 0.0, %v667
      %v669 = vpop.f32.mrb[0].mxu0
      %670 = vmatprep.mubr.bf16.mxu0 0
      %671 = vmatmul.mubr.bf16.gmra.mrb[0].mxu0 %v547
      %v672 = vpop.f32.mrb[0].mxu0
      %v673 = vadd.f32 0.0, %v672
      %v674 = vpop.f32.mrb[0].mxu0
      %v675 = vpop.f32.mrb[0].mxu0
      %v676 = vadd.f32 0.0, %v675
      %v677 = vpop.f32.mrb[0].mxu0
      %678 = vmatprep.mubr.bf16.mxu0 0
      %679 = vmatmul.mubr.bf16.gmra.mrb[0].mxu0 %v550
      %v680 = vpop.f32.mrb[0].mxu0
      %v681 = vadd.f32 0.0, %v680
      %v682 = vpop.f32.mrb[0].mxu0
      %v683 = vpop.f32.mrb[0].mxu0
      %v684 = vadd.f32 0.0, %v683
      %v685 = vpop.f32.mrb[0].mxu0
      %686 = vmatprep.mubr.bf16.mxu0 0
      %687 = vmatmul.mubr.bf16.gmra.mrb[0].mxu0 %v553
      %v688 = vpop.f32.mrb[0].mxu0
      %v689 = vadd.f32 0.0, %v688
      %v690 = vpop.f32.mrb[0].mxu0
      %v691 = vpop.f32.mrb[0].mxu0
      %v692 = vadd.f32 0.0, %v691
      %v693 = vpop.f32.mrb[0].mxu0
      %694 = vmatprep.mubr.bf16.mxu0 0
      %695 = vmatmul.mubr.bf16.gmra.mrb[0].mxu0 %v556
      %v696 = vpop.f32.mrb[0].mxu0
      %v697 = vadd.f32 0.0, %v696
      %v698 = vpop.f32.mrb[0].mxu0
      %v699 = vpop.f32.mrb[0].mxu0
      %v700 = vadd.f32 0.0, %v699
      %v701 = vpop.f32.mrb[0].mxu0
      %702 = vmatprep.mubr.bf16.mxu0 0
      %703 = vmatmul.mubr.bf16.gmra.mrb[0].mxu0 %v559
      %v704 = vpop.f32.mrb[0].mxu0
      %v705 = vadd.f32 0.0, %v704
      %v706 = vpop.f32.mrb[0].mxu0
      %v707 = vpop.f32.mrb[0].mxu0
      %v708 = vadd.f32 0.0, %v707
      %v709 = vpop.f32.mrb[0].mxu0
      %710 = vmatprep.mubr.bf16.mxu0 0
      %711 = vmatmul.mubr.bf16.gmra.mrb[0].mxu0 %v562
      %v712 = vpop.f32.mrb[0].mxu0
      %v713 = vadd.f32 0.0, %v712
      %v714 = vpop.f32.mrb[0].mxu0
      %v715 = vpop.f32.mrb[0].mxu0
      %v716 = vadd.f32 0.0, %v715
      %v717 = vpop.f32.mrb[0].mxu0
      %718 = vmatprep.mubr.bf16.mxu0 0
      %719 = vmatmul.mubr.bf16.gmra.mrb[0].mxu0 %v565
      %v720 = vpop.f32.mrb[0].mxu0
      %v721 = vadd.f32 0.0, %v720
      %v722 = vpop.f32.mrb[0].mxu0
      %v723 = vpop.f32.mrb[0].mxu0
      %v724 = vadd.f32 0.0, %v723
      %v725 = vpop.f32.mrb[0].mxu0
      %726 = vmatprep.mubr.bf16.mxu0 0
      %727 = vmatmul.mubr.bf16.gmra.mrb[0].mxu0 %v568
      %v728 = vpop.f32.mrb[0].mxu0
      %v729 = vadd.f32 0.0, %v728
      %v730 = vpop.f32.mrb[0].mxu0
      %v731 = vpop.f32.mrb[0].mxu0
      %v732 = vadd.f32 0.0, %v731
      %v733 = vpop.f32.mrb[0].mxu0
      %734 = vdwg.mxu0
      %v736 = vsel %vm521, %v455, 0
      %v739 = vsel %vm521, %v456, 0
      %v742 = vsel %vm521, %v457, 0
      %v745 = vsel %vm521, %v458, 0
      %v748 = vsel %vm521, %v459, 0
      %v751 = vsel %vm521, %v460, 0
      %v754 = vsel %vm521, %v461, 0
      %v757 = vsel %vm521, %v462, 0
      %v760 = vsel %vm521, %v463, 0
      %v763 = vsel %vm521, %v464, 0
      %v766 = vsel %vm521, %v465, 0
      %v769 = vsel %vm521, %v466, 0
      %v772 = vsel %vm521, %v467, 0
      %v775 = vsel %vm521, %v468, 0
      %v778 = vsel %vm521, %v469, 0
      %v781 = vsel %vm521, %v470, 0
      %v784 = vsel %vm570, %v519, 0
      %786 = vmatprep.subr.bf16.mxu0 0
      %787 = vmatpush1.bf16.msra.mxu0 %v784
      %788 = vmatprep.subr.bf16.mxu0 0
      %789 = vmatpush1.bf16.msra.mxu0 0
      %790 = vmatprep.subr.bf16.mxu0 0
      %791 = vmatpush1.bf16.msra.mxu0 0
      %792 = vmatprep.subr.bf16.mxu0 0
      %793 = vmatpush1.bf16.msra.mxu0 0
      %794 = vmatprep.subr.bf16.mxu0 0
      %795 = vmatpush1.bf16.msra.mxu0 0
      %796 = vmatprep.subr.bf16.mxu0 0
      %797 = vmatpush1.bf16.msra.mxu0 0
      %798 = vmatprep.subr.bf16.mxu0 0
      %799 = vmatpush1.bf16.msra.mxu0 0
      %800 = vmatprep.subr.bf16.mxu0 0
      %801 = vmatpush1.bf16.msra.mxu0 0
      %802 = vmatprep.subr.bf16.mxu0 0
      %803 = vmatpush1.bf16.msra.mxu0 0
      %804 = vmatprep.subr.bf16.mxu0 0
      %805 = vmatpush1.bf16.msra.mxu0 0
      %806 = vmatprep.subr.bf16.mxu0 0
      %807 = vmatpush1.bf16.msra.mxu0 0
      %808 = vmatprep.subr.bf16.mxu0 0
      %809 = vmatpush1.bf16.msra.mxu0 0
      %810 = vmatprep.subr.bf16.mxu0 0
      %811 = vmatpush1.bf16.msra.mxu0 0
      %812 = vmatprep.subr.bf16.mxu0 0
      %813 = vmatpush1.bf16.msra.mxu0 0
      %814 = vmatprep.subr.bf16.mxu0 0
      %815 = vmatpush1.bf16.msra.mxu0 0
      %816 = vmatprep.subr.bf16.mxu0 0
      %817 = vmatpush1.bf16.msra.mxu0 0
      %818 = vmatprep.mubr.bf16.mxu0 0
      %819 = vmatmul.mubr.bf16.gmra.mrb[0].mxu0 %v736
      %v820 = vpop.f32.mrb[0].mxu0
      %v821 = vadd.f32 %v609, %v820
      %v822 = vpop.f32.mrb[0].mxu0
      %v823 = vpop.f32.mrb[0].mxu0
      %v824 = vadd.f32 %v612, %v823
      %v825 = vpop.f32.mrb[0].mxu0
      %826 = vmatprep.mubr.bf16.mxu0 0
      %827 = vmatmul.mubr.bf16.gmra.mrb[0].mxu0 %v739
      %v828 = vpop.f32.mrb[0].mxu0
      %v829 = vadd.f32 %v617, %v828
      %v830 = vpop.f32.mrb[0].mxu0
      %v831 = vpop.f32.mrb[0].mxu0
      %v832 = vadd.f32 %v620, %v831
      %v833 = vpop.f32.mrb[0].mxu0
      %834 = vmatprep.mubr.bf16.mxu0 0
      %835 = vmatmul.mubr.bf16.gmra.mrb[0].mxu0 %v742
      %v836 = vpop.f32.mrb[0].mxu0
      %v837 = vadd.f32 %v625, %v836
      %v838 = vpop.f32.mrb[0].mxu0
      %v839 = vpop.f32.mrb[0].mxu0
      %v840 = vadd.f32 %v628, %v839
      %v841 = vpop.f32.mrb[0].mxu0
      %842 = vmatprep.mubr.bf16.mxu0 0
      %843 = vmatmul.mubr.bf16.gmra.mrb[0].mxu0 %v745
      %v844 = vpop.f32.mrb[0].mxu0
      %v845 = vadd.f32 %v633, %v844
      %v846 = vpop.f32.mrb[0].mxu0
      %v847 = vpop.f32.mrb[0].mxu0
      %v848 = vadd.f32 %v636, %v847
      %v849 = vpop.f32.mrb[0].mxu0
      %850 = vmatprep.mubr.bf16.mxu0 0
      %851 = vmatmul.mubr.bf16.gmra.mrb[0].mxu0 %v748
      %v852 = vpop.f32.mrb[0].mxu0
      %v853 = vadd.f32 %v641, %v852
      %v854 = vpop.f32.mrb[0].mxu0
      %v855 = vpop.f32.mrb[0].mxu0
      %v856 = vadd.f32 %v644, %v855
      %v857 = vpop.f32.mrb[0].mxu0
      %858 = vmatprep.mubr.bf16.mxu0 0
      %859 = vmatmul.mubr.bf16.gmra.mrb[0].mxu0 %v751
      %v860 = vpop.f32.mrb[0].mxu0
      %v861 = vadd.f32 %v649, %v860
      %v862 = vpop.f32.mrb[0].mxu0
      %v863 = vpop.f32.mrb[0].mxu0
      %v864 = vadd.f32 %v652, %v863
      %v865 = vpop.f32.mrb[0].mxu0
      %866 = vmatprep.mubr.bf16.mxu0 0
      %867 = vmatmul.mubr.bf16.gmra.mrb[0].mxu0 %v754
      %v868 = vpop.f32.mrb[0].mxu0
      %v869 = vadd.f32 %v657, %v868
      %v870 = vpop.f32.mrb[0].mxu0
      %v871 = vpop.f32.mrb[0].mxu0
      %v872 = vadd.f32 %v660, %v871
      %v873 = vpop.f32.mrb[0].mxu0
      %874 = vmatprep.mubr.bf16.mxu0 0
      %875 = vmatmul.mubr.bf16.gmra.mrb[0].mxu0 %v757
      %v876 = vpop.f32.mrb[0].mxu0
      %v877 = vadd.f32 %v665, %v876
      %v878 = vpop.f32.mrb[0].mxu0
      %v879 = vpop.f32.mrb[0].mxu0
      %v880 = vadd.f32 %v668, %v879
      %v881 = vpop.f32.mrb[0].mxu0
      %882 = vmatprep.mubr.bf16.mxu0 0
      %883 = vmatmul.mubr.bf16.gmra.mrb[0].mxu0 %v760
      %v884 = vpop.f32.mrb[0].mxu0
      %v885 = vadd.f32 %v673, %v884
      %v886 = vpop.f32.mrb[0].mxu0
      %v887 = vpop.f32.mrb[0].mxu0
      %v888 = vadd.f32 %v676, %v887
      %v889 = vpop.f32.mrb[0].mxu0
      %890 = vmatprep.mubr.bf16.mxu0 0
      %891 = vmatmul.mubr.bf16.gmra.mrb[0].mxu0 %v763
      %v892 = vpop.f32.mrb[0].mxu0
      %v893 = vadd.f32 %v681, %v892
      %v894 = vpop.f32.mrb[0].mxu0
      %v895 = vpop.f32.mrb[0].mxu0
      %v896 = vadd.f32 %v684, %v895
      %v897 = vpop.f32.mrb[0].mxu0
      %898 = vmatprep.mubr.bf16.mxu0 0
      %899 = vmatmul.mubr.bf16.gmra.mrb[0].mxu0 %v766
      %v900 = vpop.f32.mrb[0].mxu0
      %v901 = vadd.f32 %v689, %v900
      %v902 = vpop.f32.mrb[0].mxu0
      %v903 = vpop.f32.mrb[0].mxu0
      %v904 = vadd.f32 %v692, %v903
      %v905 = vpop.f32.mrb[0].mxu0
      %906 = vmatprep.mubr.bf16.mxu0 0
      %907 = vmatmul.mubr.bf16.gmra.mrb[0].mxu0 %v769
      %v908 = vpop.f32.mrb[0].mxu0
      %v909 = vadd.f32 %v697, %v908
      %v910 = vpop.f32.mrb[0].mxu0
      %v911 = vpop.f32.mrb[0].mxu0
      %v912 = vadd.f32 %v700, %v911
      %v913 = vpop.f32.mrb[0].mxu0
      %914 = vmatprep.mubr.bf16.mxu0 0
      %915 = vmatmul.mubr.bf16.gmra.mrb[0].mxu0 %v772
      %v916 = vpop.f32.mrb[0].mxu0
      %v917 = vadd.f32 %v705, %v916
      %v918 = vpop.f32.mrb[0].mxu0
      %v919 = vpop.f32.mrb[0].mxu0
      %v920 = vadd.f32 %v708, %v919
      %v921 = vpop.f32.mrb[0].mxu0
      %922 = vmatprep.mubr.bf16.mxu0 0
      %923 = vmatmul.mubr.bf16.gmra.mrb[0].mxu0 %v775
      %v924 = vpop.f32.mrb[0].mxu0
      %v925 = vadd.f32 %v713, %v924
      %v926 = vpop.f32.mrb[0].mxu0
      %v927 = vpop.f32.mrb[0].mxu0
      %v928 = vadd.f32 %v716, %v927
      %v929 = vpop.f32.mrb[0].mxu0
      %930 = vmatprep.mubr.bf16.mxu0 0
      %931 = vmatmul.mubr.bf16.gmra.mrb[0].mxu0 %v778
      %v932 = vpop.f32.mrb[0].mxu0
      %v933 = vadd.f32 %v721, %v932
      %v934 = vpop.f32.mrb[0].mxu0
      %v935 = vpop.f32.mrb[0].mxu0
      %v936 = vadd.f32 %v724, %v935
      %v937 = vpop.f32.mrb[0].mxu0
      %938 = vmatprep.mubr.bf16.mxu0 0
      %939 = vmatmul.mubr.bf16.gmra.mrb[0].mxu0 %v781
      %v940 = vpop.f32.mrb[0].mxu0
      %v941 = vadd.f32 %v729, %v940
      %v942 = vpop.f32.mrb[0].mxu0
      %v943 = vpop.f32.mrb[0].mxu0
      %v944 = vadd.f32 %v732, %v943
      %v945 = vpop.f32.mrb[0].mxu0
      %946 = vdwg.mxu0
      %v947 = vld [vmem:[%s411] sm:$0x1]
      %v949 = vlaneseq
      %v950 = vshrl.u32 %v949, 7
      %v951 = vsub.s32 0, %v950
      %v952 = vrot.slane %v947, %v951
      %v954 = vadd.f32 %v821, %v952
      %v955 = vadd.f32 %v824, %v952
      %v956 = vadd.f32 %v829, %v952
      %v957 = vadd.f32 %v832, %v952
      %v958 = vadd.f32 %v837, %v952
      %v959 = vadd.f32 %v840, %v952
      %v960 = vadd.f32 %v845, %v952
      %v961 = vadd.f32 %v848, %v952
      %v962 = vadd.f32 %v853, %v952
      %v963 = vadd.f32 %v856, %v952
      %v964 = vadd.f32 %v861, %v952
      %v965 = vadd.f32 %v864, %v952
      %v966 = vadd.f32 %v869, %v952
      %v967 = vadd.f32 %v872, %v952
      %v968 = vadd.f32 %v877, %v952
      %v969 = vadd.f32 %v880, %v952
      %v970 = vadd.f32 %v885, %v952
      %v971 = vadd.f32 %v888, %v952
      %v972 = vadd.f32 %v893, %v952
      %v973 = vadd.f32 %v896, %v952
      %v974 = vadd.f32 %v901, %v952
      %v975 = vadd.f32 %v904, %v952
      %v976 = vadd.f32 %v909, %v952
      %v977 = vadd.f32 %v912, %v952
      %v978 = vadd.f32 %v917, %v952
      %v979 = vadd.f32 %v920, %v952
      %v980 = vadd.f32 %v925, %v952
      %v981 = vadd.f32 %v928, %v952
      %v982 = vadd.f32 %v933, %v952
      %v983 = vadd.f32 %v936, %v952
      %v984 = vadd.f32 %v941, %v952
      %v985 = vadd.f32 %v944, %v952
      %v986 = vmax.f32 %v954, 0.0
      %v987 = vmax.f32 %v955, 0.0
      %v988 = vmax.f32 %v956, 0.0
      %v989 = vmax.f32 %v957, 0.0
      %v990 = vmax.f32 %v958, 0.0
      %v991 = vmax.f32 %v959, 0.0
      %v992 = vmax.f32 %v960, 0.0
      %v993 = vmax.f32 %v961, 0.0
      %v994 = vmax.f32 %v962, 0.0
      %v995 = vmax.f32 %v963, 0.0
      %v996 = vmax.f32 %v964, 0.0
      %v997 = vmax.f32 %v965, 0.0
      %v998 = vmax.f32 %v966, 0.0
      %v999 = vmax.f32 %v967, 0.0
      %v1000 = vmax.f32 %v968, 0.0
      %v1001 = vmax.f32 %v969, 0.0
      %v1002 = vmax.f32 %v970, 0.0
      %v1003 = vmax.f32 %v971, 0.0
      %v1004 = vmax.f32 %v972, 0.0
      %v1005 = vmax.f32 %v973, 0.0
      %v1006 = vmax.f32 %v974, 0.0
      %v1007 = vmax.f32 %v975, 0.0
      %v1008 = vmax.f32 %v976, 0.0
      %v1009 = vmax.f32 %v977, 0.0
      %v1010 = vmax.f32 %v978, 0.0
      %v1011 = vmax.f32 %v979, 0.0
      %v1012 = vmax.f32 %v980, 0.0
      %v1013 = vmax.f32 %v981, 0.0
      %v1014 = vmax.f32 %v982, 0.0
      %v1015 = vmax.f32 %v983, 0.0
      %v1016 = vmax.f32 %v984, 0.0
      %v1017 = vmax.f32 %v985, 0.0
      %vm1018 = vcmp.ne.f32.partialorder %v954, %v954
      %vm1019 = vcmp.ne.f32.partialorder %v955, %v955
      %vm1020 = vcmp.ne.f32.partialorder %v956, %v956
      %vm1021 = vcmp.ne.f32.partialorder %v957, %v957
      %vm1022 = vcmp.ne.f32.partialorder %v958, %v958
      %vm1023 = vcmp.ne.f32.partialorder %v959, %v959
      %vm1024 = vcmp.ne.f32.partialorder %v960, %v960
      %vm1025 = vcmp.ne.f32.partialorder %v961, %v961
      %vm1026 = vcmp.ne.f32.partialorder %v962, %v962
      %vm1027 = vcmp.ne.f32.partialorder %v963, %v963
      %vm1028 = vcmp.ne.f32.partialorder %v964, %v964
      %vm1029 = vcmp.ne.f32.partialorder %v965, %v965
      %vm1030 = vcmp.ne.f32.partialorder %v966, %v966
      %vm1031 = vcmp.ne.f32.partialorder %v967, %v967
      %vm1032 = vcmp.ne.f32.partialorder %v968, %v968
      %vm1033 = vcmp.ne.f32.partialorder %v969, %v969
      %vm1034 = vcmp.ne.f32.partialorder %v970, %v970
      %vm1035 = vcmp.ne.f32.partialorder %v971, %v971
      %vm1036 = vcmp.ne.f32.partialorder %v972, %v972
      %vm1037 = vcmp.ne.f32.partialorder %v973, %v973
      %vm1038 = vcmp.ne.f32.partialorder %v974, %v974
      %vm1039 = vcmp.ne.f32.partialorder %v975, %v975
      %vm1040 = vcmp.ne.f32.partialorder %v976, %v976
      %vm1041 = vcmp.ne.f32.partialorder %v977, %v977
      %vm1042 = vcmp.ne.f32.partialorder %v978, %v978
      %vm1043 = vcmp.ne.f32.partialorder %v979, %v979
      %vm1044 = vcmp.ne.f32.partialorder %v980, %v980
      %vm1045 = vcmp.ne.f32.partialorder %v981, %v981
      %vm1046 = vcmp.ne.f32.partialorder %v982, %v982
      %vm1047 = vcmp.ne.f32.partialorder %v983, %v983
      %vm1048 = vcmp.ne.f32.partialorder %v984, %v984
      %vm1049 = vcmp.ne.f32.partialorder %v985, %v985
      %v1050 = vadd.f32 %v954, 0.0
      %v1051 = vadd.f32 %v955, 0.0
      %v1052 = vadd.f32 %v956, 0.0
      %v1053 = vadd.f32 %v957, 0.0
      %v1054 = vadd.f32 %v958, 0.0
      %v1055 = vadd.f32 %v959, 0.0
      %v1056 = vadd.f32 %v960, 0.0
      %v1057 = vadd.f32 %v961, 0.0
      %v1058 = vadd.f32 %v962, 0.0
      %v1059 = vadd.f32 %v963, 0.0
      %v1060 = vadd.f32 %v964, 0.0
      %v1061 = vadd.f32 %v965, 0.0
      %v1062 = vadd.f32 %v966, 0.0
      %v1063 = vadd.f32 %v967, 0.0
      %v1064 = vadd.f32 %v968, 0.0
      %v1065 = vadd.f32 %v969, 0.0
      %v1066 = vadd.f32 %v970, 0.0
      %v1067 = vadd.f32 %v971, 0.0
      %v1068 = vadd.f32 %v972, 0.0
      %v1069 = vadd.f32 %v973, 0.0
      %v1070 = vadd.f32 %v974, 0.0
      %v1071 = vadd.f32 %v975, 0.0
      %v1072 = vadd.f32 %v976, 0.0
      %v1073 = vadd.f32 %v977, 0.0
      %v1074 = vadd.f32 %v978, 0.0
      %v1075 = vadd.f32 %v979, 0.0
      %v1076 = vadd.f32 %v980, 0.0
      %v1077 = vadd.f32 %v981, 0.0
      %v1078 = vadd.f32 %v982, 0.0
      %v1079 = vadd.f32 %v983, 0.0
      %v1080 = vadd.f32 %v984, 0.0
      %v1081 = vadd.f32 %v985, 0.0
      %v1082 = vand.u32 2147483647, %v954
      %v1083 = vand.u32 2147483647, %v955
      %v1084 = vand.u32 2147483647, %v956
      %v1085 = vand.u32 2147483647, %v957
      %v1086 = vand.u32 2147483647, %v958
      %v1087 = vand.u32 2147483647, %v959
      %v1088 = vand.u32 2147483647, %v960
      %v1089 = vand.u32 2147483647, %v961
      %v1090 = vand.u32 2147483647, %v962
      %v1091 = vand.u32 2147483647, %v963
      %v1092 = vand.u32 2147483647, %v964
      %v1093 = vand.u32 2147483647, %v965
      %v1094 = vand.u32 2147483647, %v966
      %v1095 = vand.u32 2147483647, %v967
      %v1096 = vand.u32 2147483647, %v968
      %v1097 = vand.u32 2147483647, %v969
      %v1098 = vand.u32 2147483647, %v970
      %v1099 = vand.u32 2147483647, %v971
      %v1100 = vand.u32 2147483647, %v972
      %v1101 = vand.u32 2147483647, %v973
      %v1102 = vand.u32 2147483647, %v974
      %v1103 = vand.u32 2147483647, %v975
      %v1104 = vand.u32 2147483647, %v976
      %v1105 = vand.u32 2147483647, %v977
      %v1106 = vand.u32 2147483647, %v978
      %v1107 = vand.u32 2147483647, %v979
      %v1108 = vand.u32 2147483647, %v980
      %v1109 = vand.u32 2147483647, %v981
      %v1110 = vand.u32 2147483647, %v982
      %v1111 = vand.u32 2147483647, %v983
      %v1112 = vand.u32 2147483647, %v984
      %v1113 = vand.u32 2147483647, %v985
      %v1114 = vsub.f32 0.0, %v1082
      %v1115 = vsub.f32 0.0, %v1083
      %v1116 = vsub.f32 0.0, %v1084
      %v1117 = vsub.f32 0.0, %v1085
      %v1118 = vsub.f32 0.0, %v1086
      %v1119 = vsub.f32 0.0, %v1087
      %v1120 = vsub.f32 0.0, %v1088
      %v1121 = vsub.f32 0.0, %v1089
      %v1122 = vsub.f32 0.0, %v1090
      %v1123 = vsub.f32 0.0, %v1091
      %v1124 = vsub.f32 0.0, %v1092
      %v1125 = vsub.f32 0.0, %v1093
      %v1126 = vsub.f32 0.0, %v1094
      %v1127 = vsub.f32 0.0, %v1095
      %v1128 = vsub.f32 0.0, %v1096
      %v1129 = vsub.f32 0.0, %v1097
      %v1130 = vsub.f32 0.0, %v1098
      %v1131 = vsub.f32 0.0, %v1099
      %v1132 = vsub.f32 0.0, %v1100
      %v1133 = vsub.f32 0.0, %v1101
      %v1134 = vsub.f32 0.0, %v1102
      %v1135 = vsub.f32 0.0, %v1103
      %v1136 = vsub.f32 0.0, %v1104
      %v1137 = vsub.f32 0.0, %v1105
      %v1138 = vsub.f32 0.0, %v1106
      %v1139 = vsub.f32 0.0, %v1107
      %v1140 = vsub.f32 0.0, %v1108
      %v1141 = vsub.f32 0.0, %v1109
      %v1142 = vsub.f32 0.0, %v1110
      %v1143 = vsub.f32 0.0, %v1111
      %v1144 = vsub.f32 0.0, %v1112
      %v1145 = vsub.f32 0.0, %v1113
      %v1146 = vmul.f32 %v1114, 1.442695
      %v1147 = vpow.pop %v1146
      %v1148 = vmul.f32 %v1115, 1.442695
      %v1149 = vpow.pop %v1148
      %v1150 = vmul.f32 %v1116, 1.442695
      %v1151 = vpow.pop %v1150
      %v1152 = vmul.f32 %v1117, 1.442695
      %v1153 = vpow.pop %v1152
      %v1154 = vmul.f32 %v1118, 1.442695
      %v1155 = vpow.pop %v1154
      %v1156 = vmul.f32 %v1119, 1.442695
      %v1157 = vpow.pop %v1156
      %v1158 = vmul.f32 %v1120, 1.442695
      %v1159 = vpow.pop %v1158
      %v1160 = vmul.f32 %v1121, 1.442695
      %v1161 = vpow.pop %v1160
      %v1162 = vmul.f32 %v1122, 1.442695
      %v1163 = vpow.pop %v1162
      %v1164 = vmul.f32 %v1123, 1.442695
      %v1165 = vpow.pop %v1164
      %v1166 = vmul.f32 %v1124, 1.442695
      %v1167 = vpow.pop %v1166
      %v1168 = vmul.f32 %v1125, 1.442695
      %v1169 = vpow.pop %v1168
      %v1170 = vmul.f32 %v1126, 1.442695
      %v1171 = vpow.pop %v1170
      %v1172 = vmul.f32 %v1127, 1.442695
      %v1173 = vpow.pop %v1172
      %v1174 = vmul.f32 %v1128, 1.442695
      %v1175 = vpow.pop %v1174
      %v1176 = vmul.f32 %v1129, 1.442695
      %v1177 = vpow.pop %v1176
      %v1178 = vmul.f32 %v1130, 1.442695
      %v1179 = vpow.pop %v1178
      %v1180 = vmul.f32 %v1131, 1.442695
      %v1181 = vpow.pop %v1180
      %v1182 = vmul.f32 %v1132, 1.442695
      %v1183 = vpow.pop %v1182
      %v1184 = vmul.f32 %v1133, 1.442695
      %v1185 = vpow.pop %v1184
      %v1186 = vmul.f32 %v1134, 1.442695
      %v1187 = vpow.pop %v1186
      %v1188 = vmul.f32 %v1135, 1.442695
      %v1189 = vpow.pop %v1188
      %v1190 = vmul.f32 %v1136, 1.442695
      %v1191 = vpow.pop %v1190
      %v1192 = vmul.f32 %v1137, 1.442695
      %v1193 = vpow.pop %v1192
      %v1194 = vmul.f32 %v1138, 1.442695
      %v1195 = vpow.pop %v1194
      %v1196 = vmul.f32 %v1139, 1.442695
      %v1197 = vpow.pop %v1196
      %v1198 = vmul.f32 %v1140, 1.442695
      %v1199 = vpow.pop %v1198
      %v1200 = vmul.f32 %v1141, 1.442695
      %v1201 = vpow.pop %v1200
      %v1202 = vmul.f32 %v1142, 1.442695
      %v1203 = vpow.pop %v1202
      %v1204 = vmul.f32 %v1143, 1.442695
      %v1205 = vpow.pop %v1204
      %v1206 = vmul.f32 %v1144, 1.442695
      %v1207 = vpow.pop %v1206
      %v1208 = vmul.f32 %v1145, 1.442695
      %v1209 = vpow.pop %v1208
      %v1210 = vadd.f32 %v1147, 1.0
      %v1211 = vlog2.pop %v1210
      %v1212 = vmul.f32 %v1211, 0.6931472
      %v1213 = vmul.f32 -0.5, %v1147
      %v1214 = vadd.f32 %v1213, 1.0
      %v1215 = vmul.f32 %v1214, %v1147
      %v1216 = vand.u32 2147483647, %v1147
      %vm1217 = vcmp.lt.f32.partialorder %v1216, 0.0004427343
      %v1218 = vsel %vm1217, %v1215, %v1212
      %v1219 = vadd.f32 %v1149, 1.0
      %v1220 = vlog2.pop %v1219
      %v1221 = vmul.f32 %v1220, 0.6931472
      %v1222 = vmul.f32 -0.5, %v1149
      %v1223 = vadd.f32 %v1222, 1.0
      %v1224 = vmul.f32 %v1223, %v1149
      %v1225 = vand.u32 2147483647, %v1149
      %vm1226 = vcmp.lt.f32.partialorder %v1225, 0.0004427343
      %v1227 = vsel %vm1226, %v1224, %v1221
      %v1228 = vadd.f32 %v1151, 1.0
      %v1229 = vlog2.pop %v1228
      %v1230 = vmul.f32 %v1229, 0.6931472
      %v1231 = vmul.f32 -0.5, %v1151
      %v1232 = vadd.f32 %v1231, 1.0
      %v1233 = vmul.f32 %v1232, %v1151
      %v1234 = vand.u32 2147483647, %v1151
      %vm1235 = vcmp.lt.f32.partialorder %v1234, 0.0004427343
      %v1236 = vsel %vm1235, %v1233, %v1230
      %v1237 = vadd.f32 %v1153, 1.0
      %v1238 = vlog2.pop %v1237
      %v1239 = vmul.f32 %v1238, 0.6931472
      %v1240 = vmul.f32 -0.5, %v1153
      %v1241 = vadd.f32 %v1240, 1.0
      %v1242 = vmul.f32 %v1241, %v1153
      %v1243 = vand.u32 2147483647, %v1153
      %vm1244 = vcmp.lt.f32.partialorder %v1243, 0.0004427343
      %v1245 = vsel %vm1244, %v1242, %v1239
      %v1246 = vadd.f32 %v1155, 1.0
      %v1247 = vlog2.pop %v1246
      %v1248 = vmul.f32 %v1247, 0.6931472
      %v1249 = vmul.f32 -0.5, %v1155
      %v1250 = vadd.f32 %v1249, 1.0
      %v1251 = vmul.f32 %v1250, %v1155
      %v1252 = vand.u32 2147483647, %v1155
      %vm1253 = vcmp.lt.f32.partialorder %v1252, 0.0004427343
      %v1254 = vsel %vm1253, %v1251, %v1248
      %v1255 = vadd.f32 %v1157, 1.0
      %v1256 = vlog2.pop %v1255
      %v1257 = vmul.f32 %v1256, 0.6931472
      %v1258 = vmul.f32 -0.5, %v1157
      %v1259 = vadd.f32 %v1258, 1.0
      %v1260 = vmul.f32 %v1259, %v1157
      %v1261 = vand.u32 2147483647, %v1157
      %vm1262 = vcmp.lt.f32.partialorder %v1261, 0.0004427343
      %v1263 = vsel %vm1262, %v1260, %v1257
      %v1264 = vadd.f32 %v1159, 1.0
      %v1265 = vlog2.pop %v1264
      %v1266 = vmul.f32 %v1265, 0.6931472
      %v1267 = vmul.f32 -0.5, %v1159
      %v1268 = vadd.f32 %v1267, 1.0
      %v1269 = vmul.f32 %v1268, %v1159
      %v1270 = vand.u32 2147483647, %v1159
      %vm1271 = vcmp.lt.f32.partialorder %v1270, 0.0004427343
      %v1272 = vsel %vm1271, %v1269, %v1266
      %v1273 = vadd.f32 %v1161, 1.0
      %v1274 = vlog2.pop %v1273
      %v1275 = vmul.f32 %v1274, 0.6931472
      %v1276 = vmul.f32 -0.5, %v1161
      %v1277 = vadd.f32 %v1276, 1.0
      %v1278 = vmul.f32 %v1277, %v1161
      %v1279 = vand.u32 2147483647, %v1161
      %vm1280 = vcmp.lt.f32.partialorder %v1279, 0.0004427343
      %v1281 = vsel %vm1280, %v1278, %v1275
      %v1282 = vadd.f32 %v1163, 1.0
      %v1283 = vlog2.pop %v1282
      %v1284 = vmul.f32 %v1283, 0.6931472
      %v1285 = vmul.f32 -0.5, %v1163
      %v1286 = vadd.f32 %v1285, 1.0
      %v1287 = vmul.f32 %v1286, %v1163
      %v1288 = vand.u32 2147483647, %v1163
      %vm1289 = vcmp.lt.f32.partialorder %v1288, 0.0004427343
      %v1290 = vsel %vm1289, %v1287, %v1284
      %v1291 = vadd.f32 %v1165, 1.0
      %v1292 = vlog2.pop %v1291
      %v1293 = vmul.f32 %v1292, 0.6931472
      %v1294 = vmul.f32 -0.5, %v1165
      %v1295 = vadd.f32 %v1294, 1.0
      %v1296 = vmul.f32 %v1295, %v1165
      %v1297 = vand.u32 2147483647, %v1165
      %vm1298 = vcmp.lt.f32.partialorder %v1297, 0.0004427343
      %v1299 = vsel %vm1298, %v1296, %v1293
      %v1300 = vadd.f32 %v1167, 1.0
      %v1301 = vlog2.pop %v1300
      %v1302 = vmul.f32 %v1301, 0.6931472
      %v1303 = vmul.f32 -0.5, %v1167
      %v1304 = vadd.f32 %v1303, 1.0
      %v1305 = vmul.f32 %v1304, %v1167
      %v1306 = vand.u32 2147483647, %v1167
      %vm1307 = vcmp.lt.f32.partialorder %v1306, 0.0004427343
      %v1308 = vsel %vm1307, %v1305, %v1302
      %v1309 = vadd.f32 %v1169, 1.0
      %v1310 = vlog2.pop %v1309
      %v1311 = vmul.f32 %v1310, 0.6931472
      %v1312 = vmul.f32 -0.5, %v1169
      %v1313 = vadd.f32 %v1312, 1.0
      %v1314 = vmul.f32 %v1313, %v1169
      %v1315 = vand.u32 2147483647, %v1169
      %vm1316 = vcmp.lt.f32.partialorder %v1315, 0.0004427343
      %v1317 = vsel %vm1316, %v1314, %v1311
      %v1318 = vadd.f32 %v1171, 1.0
      %v1319 = vlog2.pop %v1318
      %v1320 = vmul.f32 %v1319, 0.6931472
      %v1321 = vmul.f32 -0.5, %v1171
      %v1322 = vadd.f32 %v1321, 1.0
      %v1323 = vmul.f32 %v1322, %v1171
      %v1324 = vand.u32 2147483647, %v1171
      %vm1325 = vcmp.lt.f32.partialorder %v1324, 0.0004427343
      %v1326 = vsel %vm1325, %v1323, %v1320
      %v1327 = vadd.f32 %v1173, 1.0
      %v1328 = vlog2.pop %v1327
      %v1329 = vmul.f32 %v1328, 0.6931472
      %v1330 = vmul.f32 -0.5, %v1173
      %v1331 = vadd.f32 %v1330, 1.0
      %v1332 = vmul.f32 %v1331, %v1173
      %v1333 = vand.u32 2147483647, %v1173
      %vm1334 = vcmp.lt.f32.partialorder %v1333, 0.0004427343
      %v1335 = vsel %vm1334, %v1332, %v1329
      %v1336 = vadd.f32 %v1175, 1.0
      %v1337 = vlog2.pop %v1336
      %v1338 = vmul.f32 %v1337, 0.6931472
      %v1339 = vmul.f32 -0.5, %v1175
      %v1340 = vadd.f32 %v1339, 1.0
      %v1341 = vmul.f32 %v1340, %v1175
      %v1342 = vand.u32 2147483647, %v1175
      %vm1343 = vcmp.lt.f32.partialorder %v1342, 0.0004427343
      %v1344 = vsel %vm1343, %v1341, %v1338
      %v1345 = vadd.f32 %v1177, 1.0
      %v1346 = vlog2.pop %v1345
      %v1347 = vmul.f32 %v1346, 0.6931472
      %v1348 = vmul.f32 -0.5, %v1177
      %v1349 = vadd.f32 %v1348, 1.0
      %v1350 = vmul.f32 %v1349, %v1177
      %v1351 = vand.u32 2147483647, %v1177
      %vm1352 = vcmp.lt.f32.partialorder %v1351, 0.0004427343
      %v1353 = vsel %vm1352, %v1350, %v1347
      %v1354 = vadd.f32 %v1179, 1.0
      %v1355 = vlog2.pop %v1354
      %v1356 = vmul.f32 %v1355, 0.6931472
      %v1357 = vmul.f32 -0.5, %v1179
      %v1358 = vadd.f32 %v1357, 1.0
      %v1359 = vmul.f32 %v1358, %v1179
      %v1360 = vand.u32 2147483647, %v1179
      %vm1361 = vcmp.lt.f32.partialorder %v1360, 0.0004427343
      %v1362 = vsel %vm1361, %v1359, %v1356
      %v1363 = vadd.f32 %v1181, 1.0
      %v1364 = vlog2.pop %v1363
      %v1365 = vmul.f32 %v1364, 0.6931472
      %v1366 = vmul.f32 -0.5, %v1181
      %v1367 = vadd.f32 %v1366, 1.0
      %v1368 = vmul.f32 %v1367, %v1181
      %v1369 = vand.u32 2147483647, %v1181
      %vm1370 = vcmp.lt.f32.partialorder %v1369, 0.0004427343
      %v1371 = vsel %vm1370, %v1368, %v1365
      %v1372 = vadd.f32 %v1183, 1.0
      %v1373 = vlog2.pop %v1372
      %v1374 = vmul.f32 %v1373, 0.6931472
      %v1375 = vmul.f32 -0.5, %v1183
      %v1376 = vadd.f32 %v1375, 1.0
      %v1377 = vmul.f32 %v1376, %v1183
      %v1378 = vand.u32 2147483647, %v1183
      %vm1379 = vcmp.lt.f32.partialorder %v1378, 0.0004427343
      %v1380 = vsel %vm1379, %v1377, %v1374
      %v1381 = vadd.f32 %v1185, 1.0
      %v1382 = vlog2.pop %v1381
      %v1383 = vmul.f32 %v1382, 0.6931472
      %v1384 = vmul.f32 -0.5, %v1185
      %v1385 = vadd.f32 %v1384, 1.0
      %v1386 = vmul.f32 %v1385, %v1185
      %v1387 = vand.u32 2147483647, %v1185
      %vm1388 = vcmp.lt.f32.partialorder %v1387, 0.0004427343
      %v1389 = vsel %vm1388, %v1386, %v1383
      %v1390 = vadd.f32 %v1187, 1.0
      %v1391 = vlog2.pop %v1390
      %v1392 = vmul.f32 %v1391, 0.6931472
      %v1393 = vmul.f32 -0.5, %v1187
      %v1394 = vadd.f32 %v1393, 1.0
      %v1395 = vmul.f32 %v1394, %v1187
      %v1396 = vand.u32 2147483647, %v1187
      %vm1397 = vcmp.lt.f32.partialorder %v1396, 0.0004427343
      %v1398 = vsel %vm1397, %v1395, %v1392
      %v1399 = vadd.f32 %v1189, 1.0
      %v1400 = vlog2.pop %v1399
      %v1401 = vmul.f32 %v1400, 0.6931472
      %v1402 = vmul.f32 -0.5, %v1189
      %v1403 = vadd.f32 %v1402, 1.0
      %v1404 = vmul.f32 %v1403, %v1189
      %v1405 = vand.u32 2147483647, %v1189
      %vm1406 = vcmp.lt.f32.partialorder %v1405, 0.0004427343
      %v1407 = vsel %vm1406, %v1404, %v1401
      %v1408 = vadd.f32 %v1191, 1.0
      %v1409 = vlog2.pop %v1408
      %v1410 = vmul.f32 %v1409, 0.6931472
      %v1411 = vmul.f32 -0.5, %v1191
      %v1412 = vadd.f32 %v1411, 1.0
      %v1413 = vmul.f32 %v1412, %v1191
      %v1414 = vand.u32 2147483647, %v1191
      %vm1415 = vcmp.lt.f32.partialorder %v1414, 0.0004427343
      %v1416 = vsel %vm1415, %v1413, %v1410
      %v1417 = vadd.f32 %v1193, 1.0
      %v1418 = vlog2.pop %v1417
      %v1419 = vmul.f32 %v1418, 0.6931472
      %v1420 = vmul.f32 -0.5, %v1193
      %v1421 = vadd.f32 %v1420, 1.0
      %v1422 = vmul.f32 %v1421, %v1193
      %v1423 = vand.u32 2147483647, %v1193
      %vm1424 = vcmp.lt.f32.partialorder %v1423, 0.0004427343
      %v1425 = vsel %vm1424, %v1422, %v1419
      %v1426 = vadd.f32 %v1195, 1.0
      %v1427 = vlog2.pop %v1426
      %v1428 = vmul.f32 %v1427, 0.6931472
      %v1429 = vmul.f32 -0.5, %v1195
      %v1430 = vadd.f32 %v1429, 1.0
      %v1431 = vmul.f32 %v1430, %v1195
      %v1432 = vand.u32 2147483647, %v1195
      %vm1433 = vcmp.lt.f32.partialorder %v1432, 0.0004427343
      %v1434 = vsel %vm1433, %v1431, %v1428
      %v1435 = vadd.f32 %v1197, 1.0
      %v1436 = vlog2.pop %v1435
      %v1437 = vmul.f32 %v1436, 0.6931472
      %v1438 = vmul.f32 -0.5, %v1197
      %v1439 = vadd.f32 %v1438, 1.0
      %v1440 = vmul.f32 %v1439, %v1197
      %v1441 = vand.u32 2147483647, %v1197
      %vm1442 = vcmp.lt.f32.partialorder %v1441, 0.0004427343
      %v1443 = vsel %vm1442, %v1440, %v1437
      %v1444 = vadd.f32 %v1199, 1.0
      %v1445 = vlog2.pop %v1444
      %v1446 = vmul.f32 %v1445, 0.6931472
      %v1447 = vmul.f32 -0.5, %v1199
      %v1448 = vadd.f32 %v1447, 1.0
      %v1449 = vmul.f32 %v1448, %v1199
      %v1450 = vand.u32 2147483647, %v1199
      %vm1451 = vcmp.lt.f32.partialorder %v1450, 0.0004427343
      %v1452 = vsel %vm1451, %v1449, %v1446
      %v1453 = vadd.f32 %v1201, 1.0
      %v1454 = vlog2.pop %v1453
      %v1455 = vmul.f32 %v1454, 0.6931472
      %v1456 = vmul.f32 -0.5, %v1201
      %v1457 = vadd.f32 %v1456, 1.0
      %v1458 = vmul.f32 %v1457, %v1201
      %v1459 = vand.u32 2147483647, %v1201
      %vm1460 = vcmp.lt.f32.partialorder %v1459, 0.0004427343
      %v1461 = vsel %vm1460, %v1458, %v1455
      %v1462 = vadd.f32 %v1203, 1.0
      %v1463 = vlog2.pop %v1462
      %v1464 = vmul.f32 %v1463, 0.6931472
      %v1465 = vmul.f32 -0.5, %v1203
      %v1466 = vadd.f32 %v1465, 1.0
      %v1467 = vmul.f32 %v1466, %v1203
      %v1468 = vand.u32 2147483647, %v1203
      %vm1469 = vcmp.lt.f32.partialorder %v1468, 0.0004427343
      %v1470 = vsel %vm1469, %v1467, %v1464
      %v1471 = vadd.f32 %v1205, 1.0
      %v1472 = vlog2.pop %v1471
      %v1473 = vmul.f32 %v1472, 0.6931472
      %v1474 = vmul.f32 -0.5, %v1205
      %v1475 = vadd.f32 %v1474, 1.0
      %v1476 = vmul.f32 %v1475, %v1205
      %v1477 = vand.u32 2147483647, %v1205
      %vm1478 = vcmp.lt.f32.partialorder %v1477, 0.0004427343
      %v1479 = vsel %vm1478, %v1476, %v1473
      %v1480 = vadd.f32 %v1207, 1.0
      %v1481 = vlog2.pop %v1480
      %v1482 = vmul.f32 %v1481, 0.6931472
      %v1483 = vmul.f32 -0.5, %v1207
      %v1484 = vadd.f32 %v1483, 1.0
      %v1485 = vmul.f32 %v1484, %v1207
      %v1486 = vand.u32 2147483647, %v1207
      %vm1487 = vcmp.lt.f32.partialorder %v1486, 0.0004427343
      %v1488 = vsel %vm1487, %v1485, %v1482
      %v1489 = vadd.f32 %v1209, 1.0
      %v1490 = vlog2.pop %v1489
      %v1491 = vmul.f32 %v1490, 0.6931472
      %v1492 = vmul.f32 -0.5, %v1209
      %v1493 = vadd.f32 %v1492, 1.0
      %v1494 = vmul.f32 %v1493, %v1209
      %v1495 = vand.u32 2147483647, %v1209
      %vm1496 = vcmp.lt.f32.partialorder %v1495, 0.0004427343
      %v1497 = vsel %vm1496, %v1494, %v1491
      %v1498 = vadd.f32 %v986, %v1218
      %v1499 = vadd.f32 %v987, %v1227
      %v1500 = vadd.f32 %v988, %v1236
      %v1501 = vadd.f32 %v989, %v1245
      %v1502 = vadd.f32 %v990, %v1254
      %v1503 = vadd.f32 %v991, %v1263
      %v1504 = vadd.f32 %v992, %v1272
      %v1505 = vadd.f32 %v993, %v1281
      %v1506 = vadd.f32 %v994, %v1290
      %v1507 = vadd.f32 %v995, %v1299
      %v1508 = vadd.f32 %v996, %v1308
      %v1509 = vadd.f32 %v997, %v1317
      %v1510 = vadd.f32 %v998, %v1326
      %v1511 = vadd.f32 %v999, %v1335
      %v1512 = vadd.f32 %v1000, %v1344
      %v1513 = vadd.f32 %v1001, %v1353
      %v1514 = vadd.f32 %v1002, %v1362
      %v1515 = vadd.f32 %v1003, %v1371
      %v1516 = vadd.f32 %v1004, %v1380
      %v1517 = vadd.f32 %v1005, %v1389
      %v1518 = vadd.f32 %v1006, %v1398
      %v1519 = vadd.f32 %v1007, %v1407
      %v1520 = vadd.f32 %v1008, %v1416
      %v1521 = vadd.f32 %v1009, %v1425
      %v1522 = vadd.f32 %v1010, %v1434
      %v1523 = vadd.f32 %v1011, %v1443
      %v1524 = vadd.f32 %v1012, %v1452
      %v1525 = vadd.f32 %v1013, %v1461
      %v1526 = vadd.f32 %v1014, %v1470
      %v1527 = vadd.f32 %v1015, %v1479
      %v1528 = vadd.f32 %v1016, %v1488
      %v1529 = vadd.f32 %v1017, %v1497
      %v1530 = vsel %vm1018, %v1050, %v1498
      %v1531 = vsel %vm1019, %v1051, %v1499
      %v1532 = vsel %vm1020, %v1052, %v1500
      %v1533 = vsel %vm1021, %v1053, %v1501
      %v1534 = vsel %vm1022, %v1054, %v1502
      %v1535 = vsel %vm1023, %v1055, %v1503
      %v1536 = vsel %vm1024, %v1056, %v1504
      %v1537 = vsel %vm1025, %v1057, %v1505
      %v1538 = vsel %vm1026, %v1058, %v1506
      %v1539 = vsel %vm1027, %v1059, %v1507
      %v1540 = vsel %vm1028, %v1060, %v1508
      %v1541 = vsel %vm1029, %v1061, %v1509
      %v1542 = vsel %vm1030, %v1062, %v1510
      %v1543 = vsel %vm1031, %v1063, %v1511
      %v1544 = vsel %vm1032, %v1064, %v1512
      %v1545 = vsel %vm1033, %v1065, %v1513
      %v1546 = vsel %vm1034, %v1066, %v1514
      %v1547 = vsel %vm1035, %v1067, %v1515
      %v1548 = vsel %vm1036, %v1068, %v1516
      %v1549 = vsel %vm1037, %v1069, %v1517
      %v1550 = vsel %vm1038, %v1070, %v1518
      %v1551 = vsel %vm1039, %v1071, %v1519
      %v1552 = vsel %vm1040, %v1072, %v1520
      %v1553 = vsel %vm1041, %v1073, %v1521
      %v1554 = vsel %vm1042, %v1074, %v1522
      %v1555 = vsel %vm1043, %v1075, %v1523
      %v1556 = vsel %vm1044, %v1076, %v1524
      %v1557 = vsel %vm1045, %v1077, %v1525
      %v1558 = vsel %vm1046, %v1078, %v1526
      %v1559 = vsel %vm1047, %v1079, %v1527
      %v1560 = vsel %vm1048, %v1080, %v1528
      %v1561 = vsel %vm1049, %v1081, %v1529
      %v1562 = vpack.c.bf16 %v1531, %v1530
      %v1563 = vpack.c.bf16 %v1533, %v1532
      %v1564 = vpack.c.bf16 %v1535, %v1534
      %v1565 = vpack.c.bf16 %v1537, %v1536
      %v1566 = vpack.c.bf16 %v1539, %v1538
      %v1567 = vpack.c.bf16 %v1541, %v1540
      %v1568 = vpack.c.bf16 %v1543, %v1542
      %v1569 = vpack.c.bf16 %v1545, %v1544
      %v1570 = vpack.c.bf16 %v1547, %v1546
      %v1571 = vpack.c.bf16 %v1549, %v1548
      %v1572 = vpack.c.bf16 %v1551, %v1550
      %v1573 = vpack.c.bf16 %v1553, %v1552
      %v1574 = vpack.c.bf16 %v1555, %v1554
      %v1575 = vpack.c.bf16 %v1557, %v1556
      %v1576 = vpack.c.bf16 %v1559, %v1558
      %v1577 = vpack.c.bf16 %v1561, %v1560
      %v1578 = vld [vmem:[%s5] sm:$0xf]
      %v1579 = vld [vmem:[%s5 + $0x4] sm:$0xf]
      %v1580 = vld [vmem:[%s5 + $0x8] sm:$0xf]
      %v1581 = vld [vmem:[%s5 + $0xc] sm:$0xf]
      %v1582 = vld [vmem:[%s5 + $0x10] sm:$0xf]
      %v1583 = vld [vmem:[%s5 + $0x14] sm:$0xf]
      %v1584 = vld [vmem:[%s5 + $0x18] sm:$0xf]
      %v1585 = vld [vmem:[%s5 + $0x1c] sm:$0xf]
      %v1586 = vld [vmem:[%s5 + $0x20] sm:$0xf]
      %v1587 = vld [vmem:[%s5 + $0x24] sm:$0xf]
      %v1588 = vld [vmem:[%s5 + $0x28] sm:$0xf]
      %v1589 = vld [vmem:[%s5 + $0x2c] sm:$0xf]
      %v1590 = vld [vmem:[%s5 + $0x30] sm:$0xf]
      %v1591 = vld [vmem:[%s5 + $0x34] sm:$0xf]
      %v1592 = vld [vmem:[%s5 + $0x38] sm:$0xf]
      %v1593 = vld [vmem:[%s5 + $0x3c] sm:$0xf]
      %v1594 = vld [vmem:[%s6] sm:$0x1]
      %v1596 = vlaneseq
      %v1597 = vshrl.u32 %v1596, 7
      %v1598 = vsub.s32 0, %v1597
      %v1599 = vrot.slane %v1594, %v1598
      %v1617 = vunpack.c.l.b16 %v1578
      %v1618 = vunpack.c.l.b16 %v1579
      %v1619 = vunpack.c.l.b16 %v1580
      %v1620 = vunpack.c.l.b16 %v1581
      %v1621 = vunpack.c.l.b16 %v1582
      %v1622 = vunpack.c.l.b16 %v1583
      %v1623 = vunpack.c.l.b16 %v1584
      %v1624 = vunpack.c.l.b16 %v1585
      %v1625 = vunpack.c.l.b16 %v1586
      %v1626 = vunpack.c.l.b16 %v1587
      %v1627 = vunpack.c.l.b16 %v1588
      %v1628 = vunpack.c.l.b16 %v1589
      %v1629 = vunpack.c.l.b16 %v1590
      %v1630 = vunpack.c.l.b16 %v1591
      %v1631 = vunpack.c.l.b16 %v1592
      %v1632 = vunpack.c.l.b16 %v1593
      %v1633 = vpack.c.b16 %v1618, %v1617
      %v1634 = vpack.c.b16 %v1620, %v1619
      %v1635 = vpack.c.b16 %v1622, %v1621
      %v1636 = vpack.c.b16 %v1624, %v1623
      %v1637 = vpack.c.b16 %v1626, %v1625
      %v1638 = vpack.c.b16 %v1628, %v1627
      %v1639 = vpack.c.b16 %v1630, %v1629
      %v1640 = vpack.c.b16 %v1632, %v1631
      %1649 = vmatprep.subr.bf16.mxu0 0
      %1650 = vmatpush1.bf16.msra.mxu0 %v1633
      %1651 = vmatprep.subr.bf16.mxu0 0
      %1652 = vmatpush1.bf16.msra.mxu0 %v1634
      %1653 = vmatprep.subr.bf16.mxu0 0
      %1654 = vmatpush1.bf16.msra.mxu0 %v1635
      %1655 = vmatprep.subr.bf16.mxu0 0
      %1656 = vmatpush1.bf16.msra.mxu0 %v1636
      %1657 = vmatprep.subr.bf16.mxu0 0
      %1658 = vmatpush1.bf16.msra.mxu0 %v1637
      %1659 = vmatprep.subr.bf16.mxu0 0
      %1660 = vmatpush1.bf16.msra.mxu0 %v1638
      %1661 = vmatprep.subr.bf16.mxu0 0
      %1662 = vmatpush1.bf16.msra.mxu0 %v1639
      %1663 = vmatprep.subr.bf16.mxu0 0
      %1664 = vmatpush1.bf16.msra.mxu0 %v1640
      %1665 = vmatprep.subr.bf16.mxu0 0
      %1666 = vmatpush1.bf16.msra.mxu0 0
      %1667 = vmatprep.subr.bf16.mxu0 0
      %1668 = vmatpush1.bf16.msra.mxu0 0
      %1669 = vmatprep.subr.bf16.mxu0 0
      %1670 = vmatpush1.bf16.msra.mxu0 0
      %1671 = vmatprep.subr.bf16.mxu0 0
      %1672 = vmatpush1.bf16.msra.mxu0 0
      %1673 = vmatprep.subr.bf16.mxu0 0
      %1674 = vmatpush1.bf16.msra.mxu0 0
      %1675 = vmatprep.subr.bf16.mxu0 0
      %1676 = vmatpush1.bf16.msra.mxu0 0
      %1677 = vmatprep.subr.bf16.mxu0 0
      %1678 = vmatpush1.bf16.msra.mxu0 0
      %1679 = vmatprep.subr.bf16.mxu0 0
      %1680 = vmatpush1.bf16.msra.mxu0 0
      %1681 = vmatprep.mubr.bf16.mxu0 0
      %1682 = vmatmul.mubr.bf16.gmra.mrb[0].mxu0 %v1562
      %v1683 = vpop.f32.mrb[0].mxu0
      %v1684 = vadd.f32 %v1599, %v1683
      %v1685 = vpop.f32.mrb[0].mxu0
      %v1686 = vpop.f32.mrb[0].mxu0
      %v1687 = vadd.f32 %v1599, %v1686
      %v1688 = vpop.f32.mrb[0].mxu0
      %1689 = vmatprep.mubr.bf16.mxu0 0
      %1690 = vmatmul.mubr.bf16.gmra.mrb[0].mxu0 %v1563
      %v1691 = vpop.f32.mrb[0].mxu0
      %v1692 = vadd.f32 %v1599, %v1691
      %v1693 = vpop.f32.mrb[0].mxu0
      %v1694 = vpop.f32.mrb[0].mxu0
      %v1695 = vadd.f32 %v1599, %v1694
      %v1696 = vpop.f32.mrb[0].mxu0
      %1697 = vmatprep.mubr.bf16.mxu0 0
      %1698 = vmatmul.mubr.bf16.gmra.mrb[0].mxu0 %v1564
      %v1699 = vpop.f32.mrb[0].mxu0
      %v1700 = vadd.f32 %v1599, %v1699
      %v1701 = vpop.f32.mrb[0].mxu0
      %v1702 = vpop.f32.mrb[0].mxu0
      %v1703 = vadd.f32 %v1599, %v1702
      %v1704 = vpop.f32.mrb[0].mxu0
      %1705 = vmatprep.mubr.bf16.mxu0 0
      %1706 = vmatmul.mubr.bf16.gmra.mrb[0].mxu0 %v1565
      %v1707 = vpop.f32.mrb[0].mxu0
      %v1708 = vadd.f32 %v1599, %v1707
      %v1709 = vpop.f32.mrb[0].mxu0
      %v1710 = vpop.f32.mrb[0].mxu0
      %v1711 = vadd.f32 %v1599, %v1710
      %v1712 = vpop.f32.mrb[0].mxu0
      %1713 = vmatprep.mubr.bf16.mxu0 0
      %1714 = vmatmul.mubr.bf16.gmra.mrb[0].mxu0 %v1566
      %v1715 = vpop.f32.mrb[0].mxu0
      %v1716 = vadd.f32 %v1599, %v1715
      %v1717 = vpop.f32.mrb[0].mxu0
      %v1718 = vpop.f32.mrb[0].mxu0
      %v1719 = vadd.f32 %v1599, %v1718
      %v1720 = vpop.f32.mrb[0].mxu0
      %1721 = vmatprep.mubr.bf16.mxu0 0
      %1722 = vmatmul.mubr.bf16.gmra.mrb[0].mxu0 %v1567
      %v1723 = vpop.f32.mrb[0].mxu0
      %v1724 = vadd.f32 %v1599, %v1723
      %v1725 = vpop.f32.mrb[0].mxu0
      %v1726 = vpop.f32.mrb[0].mxu0
      %v1727 = vadd.f32 %v1599, %v1726
      %v1728 = vpop.f32.mrb[0].mxu0
      %1729 = vmatprep.mubr.bf16.mxu0 0
      %1730 = vmatmul.mubr.bf16.gmra.mrb[0].mxu0 %v1568
      %v1731 = vpop.f32.mrb[0].mxu0
      %v1732 = vadd.f32 %v1599, %v1731
      %v1733 = vpop.f32.mrb[0].mxu0
      %v1734 = vpop.f32.mrb[0].mxu0
      %v1735 = vadd.f32 %v1599, %v1734
      %v1736 = vpop.f32.mrb[0].mxu0
      %1737 = vmatprep.mubr.bf16.mxu0 0
      %1738 = vmatmul.mubr.bf16.gmra.mrb[0].mxu0 %v1569
      %v1739 = vpop.f32.mrb[0].mxu0
      %v1740 = vadd.f32 %v1599, %v1739
      %v1741 = vpop.f32.mrb[0].mxu0
      %v1742 = vpop.f32.mrb[0].mxu0
      %v1743 = vadd.f32 %v1599, %v1742
      %v1744 = vpop.f32.mrb[0].mxu0
      %1745 = vmatprep.mubr.bf16.mxu0 0
      %1746 = vmatmul.mubr.bf16.gmra.mrb[0].mxu0 %v1570
      %v1747 = vpop.f32.mrb[0].mxu0
      %v1748 = vadd.f32 %v1599, %v1747
      %v1749 = vpop.f32.mrb[0].mxu0
      %v1750 = vpop.f32.mrb[0].mxu0
      %v1751 = vadd.f32 %v1599, %v1750
      %v1752 = vpop.f32.mrb[0].mxu0
      %1753 = vmatprep.mubr.bf16.mxu0 0
      %1754 = vmatmul.mubr.bf16.gmra.mrb[0].mxu0 %v1571
      %v1755 = vpop.f32.mrb[0].mxu0
      %v1756 = vadd.f32 %v1599, %v1755
      %v1757 = vpop.f32.mrb[0].mxu0
      %v1758 = vpop.f32.mrb[0].mxu0
      %v1759 = vadd.f32 %v1599, %v1758
      %v1760 = vpop.f32.mrb[0].mxu0
      %1761 = vmatprep.mubr.bf16.mxu0 0
      %1762 = vmatmul.mubr.bf16.gmra.mrb[0].mxu0 %v1572
      %v1763 = vpop.f32.mrb[0].mxu0
      %v1764 = vadd.f32 %v1599, %v1763
      %v1765 = vpop.f32.mrb[0].mxu0
      %v1766 = vpop.f32.mrb[0].mxu0
      %v1767 = vadd.f32 %v1599, %v1766
      %v1768 = vpop.f32.mrb[0].mxu0
      %1769 = vmatprep.mubr.bf16.mxu0 0
      %1770 = vmatmul.mubr.bf16.gmra.mrb[0].mxu0 %v1573
      %v1771 = vpop.f32.mrb[0].mxu0
      %v1772 = vadd.f32 %v1599, %v1771
      %v1773 = vpop.f32.mrb[0].mxu0
      %v1774 = vpop.f32.mrb[0].mxu0
      %v1775 = vadd.f32 %v1599, %v1774
      %v1776 = vpop.f32.mrb[0].mxu0
      %1777 = vmatprep.mubr.bf16.mxu0 0
      %1778 = vmatmul.mubr.bf16.gmra.mrb[0].mxu0 %v1574
      %v1779 = vpop.f32.mrb[0].mxu0
      %v1780 = vadd.f32 %v1599, %v1779
      %v1781 = vpop.f32.mrb[0].mxu0
      %v1782 = vpop.f32.mrb[0].mxu0
      %v1783 = vadd.f32 %v1599, %v1782
      %v1784 = vpop.f32.mrb[0].mxu0
      %1785 = vmatprep.mubr.bf16.mxu0 0
      %1786 = vmatmul.mubr.bf16.gmra.mrb[0].mxu0 %v1575
      %v1787 = vpop.f32.mrb[0].mxu0
      %v1788 = vadd.f32 %v1599, %v1787
      %v1789 = vpop.f32.mrb[0].mxu0
      %v1790 = vpop.f32.mrb[0].mxu0
      %v1791 = vadd.f32 %v1599, %v1790
      %v1792 = vpop.f32.mrb[0].mxu0
      %1793 = vmatprep.mubr.bf16.mxu0 0
      %1794 = vmatmul.mubr.bf16.gmra.mrb[0].mxu0 %v1576
      %v1795 = vpop.f32.mrb[0].mxu0
      %v1796 = vadd.f32 %v1599, %v1795
      %v1797 = vpop.f32.mrb[0].mxu0
      %v1798 = vpop.f32.mrb[0].mxu0
      %v1799 = vadd.f32 %v1599, %v1798
      %v1800 = vpop.f32.mrb[0].mxu0
      %1801 = vmatprep.mubr.bf16.mxu0 0
      %1802 = vmatmul.mubr.bf16.gmra.mrb[0].mxu0 %v1577
      %v1803 = vpop.f32.mrb[0].mxu0
      %v1804 = vadd.f32 %v1599, %v1803
      %v1805 = vpop.f32.mrb[0].mxu0
      %v1806 = vpop.f32.mrb[0].mxu0
      %v1807 = vadd.f32 %v1599, %v1806
      %v1808 = vpop.f32.mrb[0].mxu0
      %1809 = vdwg.mxu0
      %v1810 = vmax.f32 %v1684, 0.0
      %v1811 = vmax.f32 %v1687, 0.0
      %v1812 = vmax.f32 %v1692, 0.0
      %v1813 = vmax.f32 %v1695, 0.0
      %v1814 = vmax.f32 %v1700, 0.0
      %v1815 = vmax.f32 %v1703, 0.0
      %v1816 = vmax.f32 %v1708, 0.0
      %v1817 = vmax.f32 %v1711, 0.0
      %v1818 = vmax.f32 %v1716, 0.0
      %v1819 = vmax.f32 %v1719, 0.0
      %v1820 = vmax.f32 %v1724, 0.0
      %v1821 = vmax.f32 %v1727, 0.0
      %v1822 = vmax.f32 %v1732, 0.0
      %v1823 = vmax.f32 %v1735, 0.0
      %v1824 = vmax.f32 %v1740, 0.0
      %v1825 = vmax.f32 %v1743, 0.0
      %v1826 = vmax.f32 %v1748, 0.0
      %v1827 = vmax.f32 %v1751, 0.0
      %v1828 = vmax.f32 %v1756, 0.0
      %v1829 = vmax.f32 %v1759, 0.0
      %v1830 = vmax.f32 %v1764, 0.0
      %v1831 = vmax.f32 %v1767, 0.0
      %v1832 = vmax.f32 %v1772, 0.0
      %v1833 = vmax.f32 %v1775, 0.0
      %v1834 = vmax.f32 %v1780, 0.0
      %v1835 = vmax.f32 %v1783, 0.0
      %v1836 = vmax.f32 %v1788, 0.0
      %v1837 = vmax.f32 %v1791, 0.0
      %v1838 = vmax.f32 %v1796, 0.0
      %v1839 = vmax.f32 %v1799, 0.0
      %v1840 = vmax.f32 %v1804, 0.0
      %v1841 = vmax.f32 %v1807, 0.0
      %vm1842 = vcmp.ne.f32.partialorder %v1684, %v1684
      %vm1843 = vcmp.ne.f32.partialorder %v1687, %v1687
      %vm1844 = vcmp.ne.f32.partialorder %v1692, %v1692
      %vm1845 = vcmp.ne.f32.partialorder %v1695, %v1695
      %vm1846 = vcmp.ne.f32.partialorder %v1700, %v1700
      %vm1847 = vcmp.ne.f32.partialorder %v1703, %v1703
      %vm1848 = vcmp.ne.f32.partialorder %v1708, %v1708
      %vm1849 = vcmp.ne.f32.partialorder %v1711, %v1711
      %vm1850 = vcmp.ne.f32.partialorder %v1716, %v1716
      %vm1851 = vcmp.ne.f32.partialorder %v1719, %v1719
      %vm1852 = vcmp.ne.f32.partialorder %v1724, %v1724
      %vm1853 = vcmp.ne.f32.partialorder %v1727, %v1727
      %vm1854 = vcmp.ne.f32.partialorder %v1732, %v1732
      %vm1855 = vcmp.ne.f32.partialorder %v1735, %v1735
      %vm1856 = vcmp.ne.f32.partialorder %v1740, %v1740
      %vm1857 = vcmp.ne.f32.partialorder %v1743, %v1743
      %vm1858 = vcmp.ne.f32.partialorder %v1748, %v1748
      %vm1859 = vcmp.ne.f32.partialorder %v1751, %v1751
      %vm1860 = vcmp.ne.f32.partialorder %v1756, %v1756
      %vm1861 = vcmp.ne.f32.partialorder %v1759, %v1759
      %vm1862 = vcmp.ne.f32.partialorder %v1764, %v1764
      %vm1863 = vcmp.ne.f32.partialorder %v1767, %v1767
      %vm1864 = vcmp.ne.f32.partialorder %v1772, %v1772
      %vm1865 = vcmp.ne.f32.partialorder %v1775, %v1775
      %vm1866 = vcmp.ne.f32.partialorder %v1780, %v1780
      %vm1867 = vcmp.ne.f32.partialorder %v1783, %v1783
      %vm1868 = vcmp.ne.f32.partialorder %v1788, %v1788
      %vm1869 = vcmp.ne.f32.partialorder %v1791, %v1791
      %vm1870 = vcmp.ne.f32.partialorder %v1796, %v1796
      %vm1871 = vcmp.ne.f32.partialorder %v1799, %v1799
      %vm1872 = vcmp.ne.f32.partialorder %v1804, %v1804
      %vm1873 = vcmp.ne.f32.partialorder %v1807, %v1807
      %v1874 = vadd.f32 %v1684, 0.0
      %v1875 = vadd.f32 %v1687, 0.0
      %v1876 = vadd.f32 %v1692, 0.0
      %v1877 = vadd.f32 %v1695, 0.0
      %v1878 = vadd.f32 %v1700, 0.0
      %v1879 = vadd.f32 %v1703, 0.0
      %v1880 = vadd.f32 %v1708, 0.0
      %v1881 = vadd.f32 %v1711, 0.0
      %v1882 = vadd.f32 %v1716, 0.0
      %v1883 = vadd.f32 %v1719, 0.0
      %v1884 = vadd.f32 %v1724, 0.0
      %v1885 = vadd.f32 %v1727, 0.0
      %v1886 = vadd.f32 %v1732, 0.0
      %v1887 = vadd.f32 %v1735, 0.0
      %v1888 = vadd.f32 %v1740, 0.0
      %v1889 = vadd.f32 %v1743, 0.0
      %v1890 = vadd.f32 %v1748, 0.0
      %v1891 = vadd.f32 %v1751, 0.0
      %v1892 = vadd.f32 %v1756, 0.0
      %v1893 = vadd.f32 %v1759, 0.0
      %v1894 = vadd.f32 %v1764, 0.0
      %v1895 = vadd.f32 %v1767, 0.0
      %v1896 = vadd.f32 %v1772, 0.0
      %v1897 = vadd.f32 %v1775, 0.0
      %v1898 = vadd.f32 %v1780, 0.0
      %v1899 = vadd.f32 %v1783, 0.0
      %v1900 = vadd.f32 %v1788, 0.0
      %v1901 = vadd.f32 %v1791, 0.0
      %v1902 = vadd.f32 %v1796, 0.0
      %v1903 = vadd.f32 %v1799, 0.0
      %v1904 = vadd.f32 %v1804, 0.0
      %v1905 = vadd.f32 %v1807, 0.0
      %v1906 = vand.u32 2147483647, %v1684
      %v1907 = vand.u32 2147483647, %v1687
      %v1908 = vand.u32 2147483647, %v1692
      %v1909 = vand.u32 2147483647, %v1695
      %v1910 = vand.u32 2147483647, %v1700
      %v1911 = vand.u32 2147483647, %v1703
      %v1912 = vand.u32 2147483647, %v1708
      %v1913 = vand.u32 2147483647, %v1711
      %v1914 = vand.u32 2147483647, %v1716
      %v1915 = vand.u32 2147483647, %v1719
      %v1916 = vand.u32 2147483647, %v1724
      %v1917 = vand.u32 2147483647, %v1727
      %v1918 = vand.u32 2147483647, %v1732
      %v1919 = vand.u32 2147483647, %v1735
      %v1920 = vand.u32 2147483647, %v1740
      %v1921 = vand.u32 2147483647, %v1743
      %v1922 = vand.u32 2147483647, %v1748
      %v1923 = vand.u32 2147483647, %v1751
      %v1924 = vand.u32 2147483647, %v1756
      %v1925 = vand.u32 2147483647, %v1759
      %v1926 = vand.u32 2147483647, %v1764
      %v1927 = vand.u32 2147483647, %v1767
      %v1928 = vand.u32 2147483647, %v1772
      %v1929 = vand.u32 2147483647, %v1775
      %v1930 = vand.u32 2147483647, %v1780
      %v1931 = vand.u32 2147483647, %v1783
      %v1932 = vand.u32 2147483647, %v1788
      %v1933 = vand.u32 2147483647, %v1791
      %v1934 = vand.u32 2147483647, %v1796
      %v1935 = vand.u32 2147483647, %v1799
      %v1936 = vand.u32 2147483647, %v1804
      %v1937 = vand.u32 2147483647, %v1807
      %v1938 = vsub.f32 0.0, %v1906
      %v1939 = vsub.f32 0.0, %v1907
      %v1940 = vsub.f32 0.0, %v1908
      %v1941 = vsub.f32 0.0, %v1909
      %v1942 = vsub.f32 0.0, %v1910
      %v1943 = vsub.f32 0.0, %v1911
      %v1944 = vsub.f32 0.0, %v1912
      %v1945 = vsub.f32 0.0, %v1913
      %v1946 = vsub.f32 0.0, %v1914
      %v1947 = vsub.f32 0.0, %v1915
      %v1948 = vsub.f32 0.0, %v1916
      %v1949 = vsub.f32 0.0, %v1917
      %v1950 = vsub.f32 0.0, %v1918
      %v1951 = vsub.f32 0.0, %v1919
      %v1952 = vsub.f32 0.0, %v1920
      %v1953 = vsub.f32 0.0, %v1921
      %v1954 = vsub.f32 0.0, %v1922
      %v1955 = vsub.f32 0.0, %v1923
      %v1956 = vsub.f32 0.0, %v1924
      %v1957 = vsub.f32 0.0, %v1925
      %v1958 = vsub.f32 0.0, %v1926
      %v1959 = vsub.f32 0.0, %v1927
      %v1960 = vsub.f32 0.0, %v1928
      %v1961 = vsub.f32 0.0, %v1929
      %v1962 = vsub.f32 0.0, %v1930
      %v1963 = vsub.f32 0.0, %v1931
      %v1964 = vsub.f32 0.0, %v1932
      %v1965 = vsub.f32 0.0, %v1933
      %v1966 = vsub.f32 0.0, %v1934
      %v1967 = vsub.f32 0.0, %v1935
      %v1968 = vsub.f32 0.0, %v1936
      %v1969 = vsub.f32 0.0, %v1937
      %v1970 = vmul.f32 %v1938, 1.442695
      %v1971 = vpow.pop %v1970
      %v1972 = vmul.f32 %v1939, 1.442695
      %v1973 = vpow.pop %v1972
      %v1974 = vmul.f32 %v1940, 1.442695
      %v1975 = vpow.pop %v1974
      %v1976 = vmul.f32 %v1941, 1.442695
      %v1977 = vpow.pop %v1976
      %v1978 = vmul.f32 %v1942, 1.442695
      %v1979 = vpow.pop %v1978
      %v1980 = vmul.f32 %v1943, 1.442695
      %v1981 = vpow.pop %v1980
      %v1982 = vmul.f32 %v1944, 1.442695
      %v1983 = vpow.pop %v1982
      %v1984 = vmul.f32 %v1945, 1.442695
      %v1985 = vpow.pop %v1984
      %v1986 = vmul.f32 %v1946, 1.442695
      %v1987 = vpow.pop %v1986
      %v1988 = vmul.f32 %v1947, 1.442695
      %v1989 = vpow.pop %v1988
      %v1990 = vmul.f32 %v1948, 1.442695
      %v1991 = vpow.pop %v1990
      %v1992 = vmul.f32 %v1949, 1.442695
      %v1993 = vpow.pop %v1992
      %v1994 = vmul.f32 %v1950, 1.442695
      %v1995 = vpow.pop %v1994
      %v1996 = vmul.f32 %v1951, 1.442695
      %v1997 = vpow.pop %v1996
      %v1998 = vmul.f32 %v1952, 1.442695
      %v1999 = vpow.pop %v1998
      %v2000 = vmul.f32 %v1953, 1.442695
      %v2001 = vpow.pop %v2000
      %v2002 = vmul.f32 %v1954, 1.442695
      %v2003 = vpow.pop %v2002
      %v2004 = vmul.f32 %v1955, 1.442695
      %v2005 = vpow.pop %v2004
      %v2006 = vmul.f32 %v1956, 1.442695
      %v2007 = vpow.pop %v2006
      %v2008 = vmul.f32 %v1957, 1.442695
      %v2009 = vpow.pop %v2008
      %v2010 = vmul.f32 %v1958, 1.442695
      %v2011 = vpow.pop %v2010
      %v2012 = vmul.f32 %v1959, 1.442695
      %v2013 = vpow.pop %v2012
      %v2014 = vmul.f32 %v1960, 1.442695
      %v2015 = vpow.pop %v2014
      %v2016 = vmul.f32 %v1961, 1.442695
      %v2017 = vpow.pop %v2016
      %v2018 = vmul.f32 %v1962, 1.442695
      %v2019 = vpow.pop %v2018
      %v2020 = vmul.f32 %v1963, 1.442695
      %v2021 = vpow.pop %v2020
      %v2022 = vmul.f32 %v1964, 1.442695
      %v2023 = vpow.pop %v2022
      %v2024 = vmul.f32 %v1965, 1.442695
      %v2025 = vpow.pop %v2024
      %v2026 = vmul.f32 %v1966, 1.442695
      %v2027 = vpow.pop %v2026
      %v2028 = vmul.f32 %v1967, 1.442695
      %v2029 = vpow.pop %v2028
      %v2030 = vmul.f32 %v1968, 1.442695
      %v2031 = vpow.pop %v2030
      %v2032 = vmul.f32 %v1969, 1.442695
      %v2033 = vpow.pop %v2032
      %v2034 = vadd.f32 %v1971, 1.0
      %v2035 = vlog2.pop %v2034
      %v2036 = vmul.f32 %v2035, 0.6931472
      %v2037 = vmul.f32 -0.5, %v1971
      %v2038 = vadd.f32 %v2037, 1.0
      %v2039 = vmul.f32 %v2038, %v1971
      %v2040 = vand.u32 2147483647, %v1971
      %vm2041 = vcmp.lt.f32.partialorder %v2040, 0.0004427343
      %v2042 = vsel %vm2041, %v2039, %v2036
      %v2043 = vadd.f32 %v1973, 1.0
      %v2044 = vlog2.pop %v2043
      %v2045 = vmul.f32 %v2044, 0.6931472
      %v2046 = vmul.f32 -0.5, %v1973
      %v2047 = vadd.f32 %v2046, 1.0
      %v2048 = vmul.f32 %v2047, %v1973
      %v2049 = vand.u32 2147483647, %v1973
      %vm2050 = vcmp.lt.f32.partialorder %v2049, 0.0004427343
      %v2051 = vsel %vm2050, %v2048, %v2045
      %v2052 = vadd.f32 %v1975, 1.0
      %v2053 = vlog2.pop %v2052
      %v2054 = vmul.f32 %v2053, 0.6931472
      %v2055 = vmul.f32 -0.5, %v1975
      %v2056 = vadd.f32 %v2055, 1.0
      %v2057 = vmul.f32 %v2056, %v1975
      %v2058 = vand.u32 2147483647, %v1975
      %vm2059 = vcmp.lt.f32.partialorder %v2058, 0.0004427343
      %v2060 = vsel %vm2059, %v2057, %v2054
      %v2061 = vadd.f32 %v1977, 1.0
      %v2062 = vlog2.pop %v2061
      %v2063 = vmul.f32 %v2062, 0.6931472
      %v2064 = vmul.f32 -0.5, %v1977
      %v2065 = vadd.f32 %v2064, 1.0
      %v2066 = vmul.f32 %v2065, %v1977
      %v2067 = vand.u32 2147483647, %v1977
      %vm2068 = vcmp.lt.f32.partialorder %v2067, 0.0004427343
      %v2069 = vsel %vm2068, %v2066, %v2063
      %v2070 = vadd.f32 %v1979, 1.0
      %v2071 = vlog2.pop %v2070
      %v2072 = vmul.f32 %v2071, 0.6931472
      %v2073 = vmul.f32 -0.5, %v1979
      %v2074 = vadd.f32 %v2073, 1.0
      %v2075 = vmul.f32 %v2074, %v1979
      %v2076 = vand.u32 2147483647, %v1979
      %vm2077 = vcmp.lt.f32.partialorder %v2076, 0.0004427343
      %v2078 = vsel %vm2077, %v2075, %v2072
      %v2079 = vadd.f32 %v1981, 1.0
      %v2080 = vlog2.pop %v2079
      %v2081 = vmul.f32 %v2080, 0.6931472
      %v2082 = vmul.f32 -0.5, %v1981
      %v2083 = vadd.f32 %v2082, 1.0
      %v2084 = vmul.f32 %v2083, %v1981
      %v2085 = vand.u32 2147483647, %v1981
      %vm2086 = vcmp.lt.f32.partialorder %v2085, 0.0004427343
      %v2087 = vsel %vm2086, %v2084, %v2081
      %v2088 = vadd.f32 %v1983, 1.0
      %v2089 = vlog2.pop %v2088
      %v2090 = vmul.f32 %v2089, 0.6931472
      %v2091 = vmul.f32 -0.5, %v1983
      %v2092 = vadd.f32 %v2091, 1.0
      %v2093 = vmul.f32 %v2092, %v1983
      %v2094 = vand.u32 2147483647, %v1983
      %vm2095 = vcmp.lt.f32.partialorder %v2094, 0.0004427343
      %v2096 = vsel %vm2095, %v2093, %v2090
      %v2097 = vadd.f32 %v1985, 1.0
      %v2098 = vlog2.pop %v2097
      %v2099 = vmul.f32 %v2098, 0.6931472
      %v2100 = vmul.f32 -0.5, %v1985
      %v2101 = vadd.f32 %v2100, 1.0
      %v2102 = vmul.f32 %v2101, %v1985
      %v2103 = vand.u32 2147483647, %v1985
      %vm2104 = vcmp.lt.f32.partialorder %v2103, 0.0004427343
      %v2105 = vsel %vm2104, %v2102, %v2099
      %v2106 = vadd.f32 %v1987, 1.0
      %v2107 = vlog2.pop %v2106
      %v2108 = vmul.f32 %v2107, 0.6931472
      %v2109 = vmul.f32 -0.5, %v1987
      %v2110 = vadd.f32 %v2109, 1.0
      %v2111 = vmul.f32 %v2110, %v1987
      %v2112 = vand.u32 2147483647, %v1987
      %vm2113 = vcmp.lt.f32.partialorder %v2112, 0.0004427343
      %v2114 = vsel %vm2113, %v2111, %v2108
      %v2115 = vadd.f32 %v1989, 1.0
      %v2116 = vlog2.pop %v2115
      %v2117 = vmul.f32 %v2116, 0.6931472
      %v2118 = vmul.f32 -0.5, %v1989
      %v2119 = vadd.f32 %v2118, 1.0
      %v2120 = vmul.f32 %v2119, %v1989
      %v2121 = vand.u32 2147483647, %v1989
      %vm2122 = vcmp.lt.f32.partialorder %v2121, 0.0004427343
      %v2123 = vsel %vm2122, %v2120, %v2117
      %v2124 = vadd.f32 %v1991, 1.0
      %v2125 = vlog2.pop %v2124
      %v2126 = vmul.f32 %v2125, 0.6931472
      %v2127 = vmul.f32 -0.5, %v1991
      %v2128 = vadd.f32 %v2127, 1.0
      %v2129 = vmul.f32 %v2128, %v1991
      %v2130 = vand.u32 2147483647, %v1991
      %vm2131 = vcmp.lt.f32.partialorder %v2130, 0.0004427343
      %v2132 = vsel %vm2131, %v2129, %v2126
      %v2133 = vadd.f32 %v1993, 1.0
      %v2134 = vlog2.pop %v2133
      %v2135 = vmul.f32 %v2134, 0.6931472
      %v2136 = vmul.f32 -0.5, %v1993
      %v2137 = vadd.f32 %v2136, 1.0
      %v2138 = vmul.f32 %v2137, %v1993
      %v2139 = vand.u32 2147483647, %v1993
      %vm2140 = vcmp.lt.f32.partialorder %v2139, 0.0004427343
      %v2141 = vsel %vm2140, %v2138, %v2135
      %v2142 = vadd.f32 %v1995, 1.0
      %v2143 = vlog2.pop %v2142
      %v2144 = vmul.f32 %v2143, 0.6931472
      %v2145 = vmul.f32 -0.5, %v1995
      %v2146 = vadd.f32 %v2145, 1.0
      %v2147 = vmul.f32 %v2146, %v1995
      %v2148 = vand.u32 2147483647, %v1995
      %vm2149 = vcmp.lt.f32.partialorder %v2148, 0.0004427343
      %v2150 = vsel %vm2149, %v2147, %v2144
      %v2151 = vadd.f32 %v1997, 1.0
      %v2152 = vlog2.pop %v2151
      %v2153 = vmul.f32 %v2152, 0.6931472
      %v2154 = vmul.f32 -0.5, %v1997
      %v2155 = vadd.f32 %v2154, 1.0
      %v2156 = vmul.f32 %v2155, %v1997
      %v2157 = vand.u32 2147483647, %v1997
      %vm2158 = vcmp.lt.f32.partialorder %v2157, 0.0004427343
      %v2159 = vsel %vm2158, %v2156, %v2153
      %v2160 = vadd.f32 %v1999, 1.0
      %v2161 = vlog2.pop %v2160
      %v2162 = vmul.f32 %v2161, 0.6931472
      %v2163 = vmul.f32 -0.5, %v1999
      %v2164 = vadd.f32 %v2163, 1.0
      %v2165 = vmul.f32 %v2164, %v1999
      %v2166 = vand.u32 2147483647, %v1999
      %vm2167 = vcmp.lt.f32.partialorder %v2166, 0.0004427343
      %v2168 = vsel %vm2167, %v2165, %v2162
      %v2169 = vadd.f32 %v2001, 1.0
      %v2170 = vlog2.pop %v2169
      %v2171 = vmul.f32 %v2170, 0.6931472
      %v2172 = vmul.f32 -0.5, %v2001
      %v2173 = vadd.f32 %v2172, 1.0
      %v2174 = vmul.f32 %v2173, %v2001
      %v2175 = vand.u32 2147483647, %v2001
      %vm2176 = vcmp.lt.f32.partialorder %v2175, 0.0004427343
      %v2177 = vsel %vm2176, %v2174, %v2171
      %v2178 = vadd.f32 %v2003, 1.0
      %v2179 = vlog2.pop %v2178
      %v2180 = vmul.f32 %v2179, 0.6931472
      %v2181 = vmul.f32 -0.5, %v2003
      %v2182 = vadd.f32 %v2181, 1.0
      %v2183 = vmul.f32 %v2182, %v2003
      %v2184 = vand.u32 2147483647, %v2003
      %vm2185 = vcmp.lt.f32.partialorder %v2184, 0.0004427343
      %v2186 = vsel %vm2185, %v2183, %v2180
      %v2187 = vadd.f32 %v2005, 1.0
      %v2188 = vlog2.pop %v2187
      %v2189 = vmul.f32 %v2188, 0.6931472
      %v2190 = vmul.f32 -0.5, %v2005
      %v2191 = vadd.f32 %v2190, 1.0
      %v2192 = vmul.f32 %v2191, %v2005
      %v2193 = vand.u32 2147483647, %v2005
      %vm2194 = vcmp.lt.f32.partialorder %v2193, 0.0004427343
      %v2195 = vsel %vm2194, %v2192, %v2189
      %v2196 = vadd.f32 %v2007, 1.0
      %v2197 = vlog2.pop %v2196
      %v2198 = vmul.f32 %v2197, 0.6931472
      %v2199 = vmul.f32 -0.5, %v2007
      %v2200 = vadd.f32 %v2199, 1.0
      %v2201 = vmul.f32 %v2200, %v2007
      %v2202 = vand.u32 2147483647, %v2007
      %vm2203 = vcmp.lt.f32.partialorder %v2202, 0.0004427343
      %v2204 = vsel %vm2203, %v2201, %v2198
      %v2205 = vadd.f32 %v2009, 1.0
      %v2206 = vlog2.pop %v2205
      %v2207 = vmul.f32 %v2206, 0.6931472
      %v2208 = vmul.f32 -0.5, %v2009
      %v2209 = vadd.f32 %v2208, 1.0
      %v2210 = vmul.f32 %v2209, %v2009
      %v2211 = vand.u32 2147483647, %v2009
      %vm2212 = vcmp.lt.f32.partialorder %v2211, 0.0004427343
      %v2213 = vsel %vm2212, %v2210, %v2207
      %v2214 = vadd.f32 %v2011, 1.0
      %v2215 = vlog2.pop %v2214
      %v2216 = vmul.f32 %v2215, 0.6931472
      %v2217 = vmul.f32 -0.5, %v2011
      %v2218 = vadd.f32 %v2217, 1.0
      %v2219 = vmul.f32 %v2218, %v2011
      %v2220 = vand.u32 2147483647, %v2011
      %vm2221 = vcmp.lt.f32.partialorder %v2220, 0.0004427343
      %v2222 = vsel %vm2221, %v2219, %v2216
      %v2223 = vadd.f32 %v2013, 1.0
      %v2224 = vlog2.pop %v2223
      %v2225 = vmul.f32 %v2224, 0.6931472
      %v2226 = vmul.f32 -0.5, %v2013
      %v2227 = vadd.f32 %v2226, 1.0
      %v2228 = vmul.f32 %v2227, %v2013
      %v2229 = vand.u32 2147483647, %v2013
      %vm2230 = vcmp.lt.f32.partialorder %v2229, 0.0004427343
      %v2231 = vsel %vm2230, %v2228, %v2225
      %v2232 = vadd.f32 %v2015, 1.0
      %v2233 = vlog2.pop %v2232
      %v2234 = vmul.f32 %v2233, 0.6931472
      %v2235 = vmul.f32 -0.5, %v2015
      %v2236 = vadd.f32 %v2235, 1.0
      %v2237 = vmul.f32 %v2236, %v2015
      %v2238 = vand.u32 2147483647, %v2015
      %vm2239 = vcmp.lt.f32.partialorder %v2238, 0.0004427343
      %v2240 = vsel %vm2239, %v2237, %v2234
      %v2241 = vadd.f32 %v2017, 1.0
      %v2242 = vlog2.pop %v2241
      %v2243 = vmul.f32 %v2242, 0.6931472
      %v2244 = vmul.f32 -0.5, %v2017
      %v2245 = vadd.f32 %v2244, 1.0
      %v2246 = vmul.f32 %v2245, %v2017
      %v2247 = vand.u32 2147483647, %v2017
      %vm2248 = vcmp.lt.f32.partialorder %v2247, 0.0004427343
      %v2249 = vsel %vm2248, %v2246, %v2243
      %v2250 = vadd.f32 %v2019, 1.0
      %v2251 = vlog2.pop %v2250
      %v2252 = vmul.f32 %v2251, 0.6931472
      %v2253 = vmul.f32 -0.5, %v2019
      %v2254 = vadd.f32 %v2253, 1.0
      %v2255 = vmul.f32 %v2254, %v2019
      %v2256 = vand.u32 2147483647, %v2019
      %vm2257 = vcmp.lt.f32.partialorder %v2256, 0.0004427343
      %v2258 = vsel %vm2257, %v2255, %v2252
      %v2259 = vadd.f32 %v2021, 1.0
      %v2260 = vlog2.pop %v2259
      %v2261 = vmul.f32 %v2260, 0.6931472
      %v2262 = vmul.f32 -0.5, %v2021
      %v2263 = vadd.f32 %v2262, 1.0
      %v2264 = vmul.f32 %v2263, %v2021
      %v2265 = vand.u32 2147483647, %v2021
      %vm2266 = vcmp.lt.f32.partialorder %v2265, 0.0004427343
      %v2267 = vsel %vm2266, %v2264, %v2261
      %v2268 = vadd.f32 %v2023, 1.0
      %v2269 = vlog2.pop %v2268
      %v2270 = vmul.f32 %v2269, 0.6931472
      %v2271 = vmul.f32 -0.5, %v2023
      %v2272 = vadd.f32 %v2271, 1.0
      %v2273 = vmul.f32 %v2272, %v2023
      %v2274 = vand.u32 2147483647, %v2023
      %vm2275 = vcmp.lt.f32.partialorder %v2274, 0.0004427343
      %v2276 = vsel %vm2275, %v2273, %v2270
      %v2277 = vadd.f32 %v2025, 1.0
      %v2278 = vlog2.pop %v2277
      %v2279 = vmul.f32 %v2278, 0.6931472
      %v2280 = vmul.f32 -0.5, %v2025
      %v2281 = vadd.f32 %v2280, 1.0
      %v2282 = vmul.f32 %v2281, %v2025
      %v2283 = vand.u32 2147483647, %v2025
      %vm2284 = vcmp.lt.f32.partialorder %v2283, 0.0004427343
      %v2285 = vsel %vm2284, %v2282, %v2279
      %v2286 = vadd.f32 %v2027, 1.0
      %v2287 = vlog2.pop %v2286
      %v2288 = vmul.f32 %v2287, 0.6931472
      %v2289 = vmul.f32 -0.5, %v2027
      %v2290 = vadd.f32 %v2289, 1.0
      %v2291 = vmul.f32 %v2290, %v2027
      %v2292 = vand.u32 2147483647, %v2027
      %vm2293 = vcmp.lt.f32.partialorder %v2292, 0.0004427343
      %v2294 = vsel %vm2293, %v2291, %v2288
      %v2295 = vadd.f32 %v2029, 1.0
      %v2296 = vlog2.pop %v2295
      %v2297 = vmul.f32 %v2296, 0.6931472
      %v2298 = vmul.f32 -0.5, %v2029
      %v2299 = vadd.f32 %v2298, 1.0
      %v2300 = vmul.f32 %v2299, %v2029
      %v2301 = vand.u32 2147483647, %v2029
      %vm2302 = vcmp.lt.f32.partialorder %v2301, 0.0004427343
      %v2303 = vsel %vm2302, %v2300, %v2297
      %v2304 = vadd.f32 %v2031, 1.0
      %v2305 = vlog2.pop %v2304
      %v2306 = vmul.f32 %v2305, 0.6931472
      %v2307 = vmul.f32 -0.5, %v2031
      %v2308 = vadd.f32 %v2307, 1.0
      %v2309 = vmul.f32 %v2308, %v2031
      %v2310 = vand.u32 2147483647, %v2031
      %vm2311 = vcmp.lt.f32.partialorder %v2310, 0.0004427343
      %v2312 = vsel %vm2311, %v2309, %v2306
      %v2313 = vadd.f32 %v2033, 1.0
      %v2314 = vlog2.pop %v2313
      %v2315 = vmul.f32 %v2314, 0.6931472
      %v2316 = vmul.f32 -0.5, %v2033
      %v2317 = vadd.f32 %v2316, 1.0
      %v2318 = vmul.f32 %v2317, %v2033
      %v2319 = vand.u32 2147483647, %v2033
      %vm2320 = vcmp.lt.f32.partialorder %v2319, 0.0004427343
      %v2321 = vsel %vm2320, %v2318, %v2315
      %v2322 = vadd.f32 %v1810, %v2042
      %v2323 = vadd.f32 %v1811, %v2051
      %v2324 = vadd.f32 %v1812, %v2060
      %v2325 = vadd.f32 %v1813, %v2069
      %v2326 = vadd.f32 %v1814, %v2078
      %v2327 = vadd.f32 %v1815, %v2087
      %v2328 = vadd.f32 %v1816, %v2096
      %v2329 = vadd.f32 %v1817, %v2105
      %v2330 = vadd.f32 %v1818, %v2114
      %v2331 = vadd.f32 %v1819, %v2123
      %v2332 = vadd.f32 %v1820, %v2132
      %v2333 = vadd.f32 %v1821, %v2141
      %v2334 = vadd.f32 %v1822, %v2150
      %v2335 = vadd.f32 %v1823, %v2159
      %v2336 = vadd.f32 %v1824, %v2168
      %v2337 = vadd.f32 %v1825, %v2177
      %v2338 = vadd.f32 %v1826, %v2186
      %v2339 = vadd.f32 %v1827, %v2195
      %v2340 = vadd.f32 %v1828, %v2204
      %v2341 = vadd.f32 %v1829, %v2213
      %v2342 = vadd.f32 %v1830, %v2222
      %v2343 = vadd.f32 %v1831, %v2231
      %v2344 = vadd.f32 %v1832, %v2240
      %v2345 = vadd.f32 %v1833, %v2249
      %v2346 = vadd.f32 %v1834, %v2258
      %v2347 = vadd.f32 %v1835, %v2267
      %v2348 = vadd.f32 %v1836, %v2276
      %v2349 = vadd.f32 %v1837, %v2285
      %v2350 = vadd.f32 %v1838, %v2294
      %v2351 = vadd.f32 %v1839, %v2303
      %v2352 = vadd.f32 %v1840, %v2312
      %v2353 = vadd.f32 %v1841, %v2321
      %v2354 = vsel %vm1842, %v1874, %v2322
      %v2355 = vsel %vm1843, %v1875, %v2323
      %v2356 = vsel %vm1844, %v1876, %v2324
      %v2357 = vsel %vm1845, %v1877, %v2325
      %v2358 = vsel %vm1846, %v1878, %v2326
      %v2359 = vsel %vm1847, %v1879, %v2327
      %v2360 = vsel %vm1848, %v1880, %v2328
      %v2361 = vsel %vm1849, %v1881, %v2329
      %v2362 = vsel %vm1850, %v1882, %v2330
      %v2363 = vsel %vm1851, %v1883, %v2331
      %v2364 = vsel %vm1852, %v1884, %v2332
      %v2365 = vsel %vm1853, %v1885, %v2333
      %v2366 = vsel %vm1854, %v1886, %v2334
      %v2367 = vsel %vm1855, %v1887, %v2335
      %v2368 = vsel %vm1856, %v1888, %v2336
      %v2369 = vsel %vm1857, %v1889, %v2337
      %v2370 = vsel %vm1858, %v1890, %v2338
      %v2371 = vsel %vm1859, %v1891, %v2339
      %v2372 = vsel %vm1860, %v1892, %v2340
      %v2373 = vsel %vm1861, %v1893, %v2341
      %v2374 = vsel %vm1862, %v1894, %v2342
      %v2375 = vsel %vm1863, %v1895, %v2343
      %v2376 = vsel %vm1864, %v1896, %v2344
      %v2377 = vsel %vm1865, %v1897, %v2345
      %v2378 = vsel %vm1866, %v1898, %v2346
      %v2379 = vsel %vm1867, %v1899, %v2347
      %v2380 = vsel %vm1868, %v1900, %v2348
      %v2381 = vsel %vm1869, %v1901, %v2349
      %v2382 = vsel %vm1870, %v1902, %v2350
      %v2383 = vsel %vm1871, %v1903, %v2351
      %v2384 = vsel %vm1872, %v1904, %v2352
      %v2385 = vsel %vm1873, %v1905, %v2353
      %v2386 = vpack.c.bf16 %v2355, %v2354
      %v2387 = vpack.c.bf16 %v2357, %v2356
      %v2388 = vpack.c.bf16 %v2359, %v2358
      %v2389 = vpack.c.bf16 %v2361, %v2360
      %v2390 = vpack.c.bf16 %v2363, %v2362
      %v2391 = vpack.c.bf16 %v2365, %v2364
      %v2392 = vpack.c.bf16 %v2367, %v2366
      %v2393 = vpack.c.bf16 %v2369, %v2368
      %v2394 = vpack.c.bf16 %v2371, %v2370
      %v2395 = vpack.c.bf16 %v2373, %v2372
      %v2396 = vpack.c.bf16 %v2375, %v2374
      %v2397 = vpack.c.bf16 %v2377, %v2376
      %v2398 = vpack.c.bf16 %v2379, %v2378
      %v2399 = vpack.c.bf16 %v2381, %v2380
      %v2400 = vpack.c.bf16 %v2383, %v2382
      %v2401 = vpack.c.bf16 %v2385, %v2384
      %v2402 = vld [vmem:[%s7] sm:$0xf]
      %v2403 = vld [vmem:[%s7 + $0x4] sm:$0xf]
      %v2404 = vld [vmem:[%s7 + $0x8] sm:$0xf]
      %v2405 = vld [vmem:[%s7 + $0xc] sm:$0xf]
      %v2406 = vld [vmem:[%s7 + $0x10] sm:$0xf]
      %v2407 = vld [vmem:[%s7 + $0x14] sm:$0xf]
      %v2408 = vld [vmem:[%s7 + $0x18] sm:$0xf]
      %v2409 = vld [vmem:[%s7 + $0x1c] sm:$0xf]
      %v2410 = vld [vmem:[%s7 + $0x20] sm:$0xf]
      %v2411 = vld [vmem:[%s7 + $0x24] sm:$0xf]
      %v2412 = vld [vmem:[%s7 + $0x28] sm:$0xf]
      %v2413 = vld [vmem:[%s7 + $0x2c] sm:$0xf]
      %v2414 = vld [vmem:[%s7 + $0x30] sm:$0xf]
      %v2415 = vld [vmem:[%s7 + $0x34] sm:$0xf]
      %v2416 = vld [vmem:[%s7 + $0x38] sm:$0xf]
      %v2417 = vld [vmem:[%s7 + $0x3c] sm:$0xf]
      %v2418 = vld [vmem:[%s8] sm:$0x1]
      %v2420 = vlaneseq
      %v2421 = vshrl.u32 %v2420, 7
      %v2422 = vsub.s32 0, %v2421
      %v2423 = vrot.slane %v2418, %v2422
      %v2441 = vunpack.c.l.b16 %v2402
      %v2442 = vunpack.c.l.b16 %v2403
      %v2443 = vunpack.c.l.b16 %v2404
      %v2444 = vunpack.c.l.b16 %v2405
      %v2445 = vunpack.c.l.b16 %v2406
      %v2446 = vunpack.c.l.b16 %v2407
      %v2447 = vunpack.c.l.b16 %v2408
      %v2448 = vunpack.c.l.b16 %v2409
      %v2449 = vunpack.c.l.b16 %v2410
      %v2450 = vunpack.c.l.b16 %v2411
      %v2451 = vunpack.c.l.b16 %v2412
      %v2452 = vunpack.c.l.b16 %v2413
      %v2453 = vunpack.c.l.b16 %v2414
      %v2454 = vunpack.c.l.b16 %v2415
      %v2455 = vunpack.c.l.b16 %v2416
      %v2456 = vunpack.c.l.b16 %v2417
      %v2457 = vpack.c.b16 %v2442, %v2441
      %v2458 = vpack.c.b16 %v2444, %v2443
      %v2459 = vpack.c.b16 %v2446, %v2445
      %v2460 = vpack.c.b16 %v2448, %v2447
      %v2461 = vpack.c.b16 %v2450, %v2449
      %v2462 = vpack.c.b16 %v2452, %v2451
      %v2463 = vpack.c.b16 %v2454, %v2453
      %v2464 = vpack.c.b16 %v2456, %v2455
      %2473 = vmatprep.subr.bf16.mxu0 0
      %2474 = vmatpush1.bf16.msra.mxu0 %v2457
      %2475 = vmatprep.subr.bf16.mxu0 0
      %2476 = vmatpush1.bf16.msra.mxu0 %v2458
      %2477 = vmatprep.subr.bf16.mxu0 0
      %2478 = vmatpush1.bf16.msra.mxu0 %v2459
      %2479 = vmatprep.subr.bf16.mxu0 0
      %2480 = vmatpush1.bf16.msra.mxu0 %v2460
      %2481 = vmatprep.subr.bf16.mxu0 0
      %2482 = vmatpush1.bf16.msra.mxu0 %v2461
      %2483 = vmatprep.subr.bf16.mxu0 0
      %2484 = vmatpush1.bf16.msra.mxu0 %v2462
      %2485 = vmatprep.subr.bf16.mxu0 0
      %2486 = vmatpush1.bf16.msra.mxu0 %v2463
      %2487 = vmatprep.subr.bf16.mxu0 0
      %2488 = vmatpush1.bf16.msra.mxu0 %v2464
      %2489 = vmatprep.subr.bf16.mxu0 0
      %2490 = vmatpush1.bf16.msra.mxu0 0
      %2491 = vmatprep.subr.bf16.mxu0 0
      %2492 = vmatpush1.bf16.msra.mxu0 0
      %2493 = vmatprep.subr.bf16.mxu0 0
      %2494 = vmatpush1.bf16.msra.mxu0 0
      %2495 = vmatprep.subr.bf16.mxu0 0
      %2496 = vmatpush1.bf16.msra.mxu0 0
      %2497 = vmatprep.subr.bf16.mxu0 0
      %2498 = vmatpush1.bf16.msra.mxu0 0
      %2499 = vmatprep.subr.bf16.mxu0 0
      %2500 = vmatpush1.bf16.msra.mxu0 0
      %2501 = vmatprep.subr.bf16.mxu0 0
      %2502 = vmatpush1.bf16.msra.mxu0 0
      %2503 = vmatprep.subr.bf16.mxu0 0
      %2504 = vmatpush1.bf16.msra.mxu0 0
      %2505 = vmatprep.mubr.bf16.mxu0 0
      %2506 = vmatmul.mubr.bf16.gmra.mrb[0].mxu0 %v2386
      %v2507 = vpop.f32.mrb[0].mxu0
      %v2508 = vadd.f32 %v2423, %v2507
      %v2509 = vpop.f32.mrb[0].mxu0
      %v2510 = vpop.f32.mrb[0].mxu0
      %v2511 = vadd.f32 %v2423, %v2510
      %v2512 = vpop.f32.mrb[0].mxu0
      %2513 = vmatprep.mubr.bf16.mxu0 0
      %2514 = vmatmul.mubr.bf16.gmra.mrb[0].mxu0 %v2387
      %v2515 = vpop.f32.mrb[0].mxu0
      %v2516 = vadd.f32 %v2423, %v2515
      %v2517 = vpop.f32.mrb[0].mxu0
      %v2518 = vpop.f32.mrb[0].mxu0
      %v2519 = vadd.f32 %v2423, %v2518
      %v2520 = vpop.f32.mrb[0].mxu0
      %2521 = vmatprep.mubr.bf16.mxu0 0
      %2522 = vmatmul.mubr.bf16.gmra.mrb[0].mxu0 %v2388
      %v2523 = vpop.f32.mrb[0].mxu0
      %v2524 = vadd.f32 %v2423, %v2523
      %v2525 = vpop.f32.mrb[0].mxu0
      %v2526 = vpop.f32.mrb[0].mxu0
      %v2527 = vadd.f32 %v2423, %v2526
      %v2528 = vpop.f32.mrb[0].mxu0
      %2529 = vmatprep.mubr.bf16.mxu0 0
      %2530 = vmatmul.mubr.bf16.gmra.mrb[0].mxu0 %v2389
      %v2531 = vpop.f32.mrb[0].mxu0
      %v2532 = vadd.f32 %v2423, %v2531
      %v2533 = vpop.f32.mrb[0].mxu0
      %v2534 = vpop.f32.mrb[0].mxu0
      %v2535 = vadd.f32 %v2423, %v2534
      %v2536 = vpop.f32.mrb[0].mxu0
      %2537 = vmatprep.mubr.bf16.mxu0 0
      %2538 = vmatmul.mubr.bf16.gmra.mrb[0].mxu0 %v2390
      %v2539 = vpop.f32.mrb[0].mxu0
      %v2540 = vadd.f32 %v2423, %v2539
      %v2541 = vpop.f32.mrb[0].mxu0
      %v2542 = vpop.f32.mrb[0].mxu0
      %v2543 = vadd.f32 %v2423, %v2542
      %v2544 = vpop.f32.mrb[0].mxu0
      %2545 = vmatprep.mubr.bf16.mxu0 0
      %2546 = vmatmul.mubr.bf16.gmra.mrb[0].mxu0 %v2391
      %v2547 = vpop.f32.mrb[0].mxu0
      %v2548 = vadd.f32 %v2423, %v2547
      %v2549 = vpop.f32.mrb[0].mxu0
      %v2550 = vpop.f32.mrb[0].mxu0
      %v2551 = vadd.f32 %v2423, %v2550
      %v2552 = vpop.f32.mrb[0].mxu0
      %2553 = vmatprep.mubr.bf16.mxu0 0
      %2554 = vmatmul.mubr.bf16.gmra.mrb[0].mxu0 %v2392
      %v2555 = vpop.f32.mrb[0].mxu0
      %v2556 = vadd.f32 %v2423, %v2555
      %v2557 = vpop.f32.mrb[0].mxu0
      %v2558 = vpop.f32.mrb[0].mxu0
      %v2559 = vadd.f32 %v2423, %v2558
      %v2560 = vpop.f32.mrb[0].mxu0
      %2561 = vmatprep.mubr.bf16.mxu0 0
      %2562 = vmatmul.mubr.bf16.gmra.mrb[0].mxu0 %v2393
      %v2563 = vpop.f32.mrb[0].mxu0
      %v2564 = vadd.f32 %v2423, %v2563
      %v2565 = vpop.f32.mrb[0].mxu0
      %v2566 = vpop.f32.mrb[0].mxu0
      %v2567 = vadd.f32 %v2423, %v2566
      %v2568 = vpop.f32.mrb[0].mxu0
      %2569 = vmatprep.mubr.bf16.mxu0 0
      %2570 = vmatmul.mubr.bf16.gmra.mrb[0].mxu0 %v2394
      %v2571 = vpop.f32.mrb[0].mxu0
      %v2572 = vadd.f32 %v2423, %v2571
      %v2573 = vpop.f32.mrb[0].mxu0
      %v2574 = vpop.f32.mrb[0].mxu0
      %v2575 = vadd.f32 %v2423, %v2574
      %v2576 = vpop.f32.mrb[0].mxu0
      %2577 = vmatprep.mubr.bf16.mxu0 0
      %2578 = vmatmul.mubr.bf16.gmra.mrb[0].mxu0 %v2395
      %v2579 = vpop.f32.mrb[0].mxu0
      %v2580 = vadd.f32 %v2423, %v2579
      %v2581 = vpop.f32.mrb[0].mxu0
      %v2582 = vpop.f32.mrb[0].mxu0
      %v2583 = vadd.f32 %v2423, %v2582
      %v2584 = vpop.f32.mrb[0].mxu0
      %2585 = vmatprep.mubr.bf16.mxu0 0
      %2586 = vmatmul.mubr.bf16.gmra.mrb[0].mxu0 %v2396
      %v2587 = vpop.f32.mrb[0].mxu0
      %v2588 = vadd.f32 %v2423, %v2587
      %v2589 = vpop.f32.mrb[0].mxu0
      %v2590 = vpop.f32.mrb[0].mxu0
      %v2591 = vadd.f32 %v2423, %v2590
      %v2592 = vpop.f32.mrb[0].mxu0
      %2593 = vmatprep.mubr.bf16.mxu0 0
      %2594 = vmatmul.mubr.bf16.gmra.mrb[0].mxu0 %v2397
      %v2595 = vpop.f32.mrb[0].mxu0
      %v2596 = vadd.f32 %v2423, %v2595
      %v2597 = vpop.f32.mrb[0].mxu0
      %v2598 = vpop.f32.mrb[0].mxu0
      %v2599 = vadd.f32 %v2423, %v2598
      %v2600 = vpop.f32.mrb[0].mxu0
      %2601 = vmatprep.mubr.bf16.mxu0 0
      %2602 = vmatmul.mubr.bf16.gmra.mrb[0].mxu0 %v2398
      %v2603 = vpop.f32.mrb[0].mxu0
      %v2604 = vadd.f32 %v2423, %v2603
      %v2605 = vpop.f32.mrb[0].mxu0
      %v2606 = vpop.f32.mrb[0].mxu0
      %v2607 = vadd.f32 %v2423, %v2606
      %v2608 = vpop.f32.mrb[0].mxu0
      %2609 = vmatprep.mubr.bf16.mxu0 0
      %2610 = vmatmul.mubr.bf16.gmra.mrb[0].mxu0 %v2399
      %v2611 = vpop.f32.mrb[0].mxu0
      %v2612 = vadd.f32 %v2423, %v2611
      %v2613 = vpop.f32.mrb[0].mxu0
      %v2614 = vpop.f32.mrb[0].mxu0
      %v2615 = vadd.f32 %v2423, %v2614
      %v2616 = vpop.f32.mrb[0].mxu0
      %2617 = vmatprep.mubr.bf16.mxu0 0
      %2618 = vmatmul.mubr.bf16.gmra.mrb[0].mxu0 %v2400
      %v2619 = vpop.f32.mrb[0].mxu0
      %v2620 = vadd.f32 %v2423, %v2619
      %v2621 = vpop.f32.mrb[0].mxu0
      %v2622 = vpop.f32.mrb[0].mxu0
      %v2623 = vadd.f32 %v2423, %v2622
      %v2624 = vpop.f32.mrb[0].mxu0
      %2625 = vmatprep.mubr.bf16.mxu0 0
      %2626 = vmatmul.mubr.bf16.gmra.mrb[0].mxu0 %v2401
      %v2627 = vpop.f32.mrb[0].mxu0
      %v2628 = vadd.f32 %v2423, %v2627
      %v2629 = vpop.f32.mrb[0].mxu0
      %v2630 = vpop.f32.mrb[0].mxu0
      %v2631 = vadd.f32 %v2423, %v2630
      %v2632 = vpop.f32.mrb[0].mxu0
      %2633 = vdwg.mxu0
      %2634 = vst.msk [vmem:[%s420] sm:$0xff] %vm521, %v2508
      %2635 = vst.msk [vmem:[%s420 + $0x8] sm:$0xff] %vm521, %v2511
      %2636 = vst.msk [vmem:[%s420 + $0x10] sm:$0xff] %vm521, %v2516
      %2637 = vst.msk [vmem:[%s420 + $0x18] sm:$0xff] %vm521, %v2519
      %2638 = vst.msk [vmem:[%s420 + $0x20] sm:$0xff] %vm521, %v2524
      %2639 = vst.msk [vmem:[%s420 + $0x28] sm:$0xff] %vm521, %v2527
      %2640 = vst.msk [vmem:[%s420 + $0x30] sm:$0xff] %vm521, %v2532
      %2641 = vst.msk [vmem:[%s420 + $0x38] sm:$0xff] %vm521, %v2535
      %2642 = vst.msk [vmem:[%s420 + $0x40] sm:$0xff] %vm521, %v2540
      %2643 = vst.msk [vmem:[%s420 + $0x48] sm:$0xff] %vm521, %v2543
      %2644 = vst.msk [vmem:[%s420 + $0x50] sm:$0xff] %vm521, %v2548
      %2645 = vst.msk [vmem:[%s420 + $0x58] sm:$0xff] %vm521, %v2551
      %2646 = vst.msk [vmem:[%s420 + $0x60] sm:$0xff] %vm521, %v2556
      %2647 = vst.msk [vmem:[%s420 + $0x68] sm:$0xff] %vm521, %v2559
      %2648 = vst.msk [vmem:[%s420 + $0x70] sm:$0xff] %vm521, %v2564
      %2649 = vst.msk [vmem:[%s420 + $0x78] sm:$0xff] %vm521, %v2567
      %2650 = vst.msk [vmem:[%s420 + $0x80] sm:$0xff] %vm521, %v2572
      %2651 = vst.msk [vmem:[%s420 + $0x88] sm:$0xff] %vm521, %v2575
      %2652 = vst.msk [vmem:[%s420 + $0x90] sm:$0xff] %vm521, %v2580
      %2653 = vst.msk [vmem:[%s420 + $0x98] sm:$0xff] %vm521, %v2583
      %2654 = vst.msk [vmem:[%s420 + $0xa0] sm:$0xff] %vm521, %v2588
      %2655 = vst.msk [vmem:[%s420 + $0xa8] sm:$0xff] %vm521, %v2591
      %2656 = vst.msk [vmem:[%s420 + $0xb0] sm:$0xff] %vm521, %v2596
      %2657 = vst.msk [vmem:[%s420 + $0xb8] sm:$0xff] %vm521, %v2599
      %2658 = vst.msk [vmem:[%s420 + $0xc0] sm:$0xff] %vm521, %v2604
      %2659 = vst.msk [vmem:[%s420 + $0xc8] sm:$0xff] %vm521, %v2607
      %2660 = vst.msk [vmem:[%s420 + $0xd0] sm:$0xff] %vm521, %v2612
      %2661 = vst.msk [vmem:[%s420 + $0xd8] sm:$0xff] %vm521, %v2615
      %2662 = vst.msk [vmem:[%s420 + $0xe0] sm:$0xff] %vm521, %v2620
      %2663 = vst.msk [vmem:[%s420 + $0xe8] sm:$0xff] %vm521, %v2623
      %2664 = vst.msk [vmem:[%s420 + $0xf0] sm:$0xff] %vm521, %v2628
      %2665 = vst.msk [vmem:[%s420 + $0xf8] sm:$0xff] %vm521, %v2631
      %s2666 = smul.u32 32, %s25
      %p2667 = scmp.lt.s32.totalorder %s24, 1
      %s2668 = scalar_select %p2667, %s24, 1
      %p2669 = scmp.lt.s32.totalorder %s2666, 63
      %s2670 = scalar_select %p2669, %s2666, 63
      %s2671 = smul.addr %s2668, 64
      %s2672 = sadd.s32 %s2670, %s2671
      %s2673 = smul.addr %s2672, 8
      %s2674 = scalar_lea.vmem %s9, %s2673
      // Predicated region
      $region57: #{tpu_custom_call.1} parent=55 // pred_check
        %p2675 = pneg %p260
      $region58: #{tpu_custom_call.1} parent=55 // pred_check_branch
        %2677 = sbr.rel (%p2675) target = $region60
      $region59: #{tpu_custom_call.1} parent=55 // pred_region
        %s2678 = smul.u32 32, %s25
      $region60: #{tpu_custom_call.1} parent=55 // pred_fallthru
        _
    $region56: #{tpu_custom_call.1} parent=5 // pred_fallthru
      _
    %p2679 = scmp.le.s32.totalorder 2, %s15
    // Predicated region
    $region61: #{tpu_custom_call.1} parent=5 // pred_check
      %p2680 = pneg %p2679
    $region62: #{tpu_custom_call.1} parent=5 // pred_check_branch
      %2682 = sbr.rel (%p2680) target = $region64
    $region63: #{tpu_custom_call.1} parent=5 // pred_region
      %s2683 = ssub.s32 %s15, 2
      // Predicated region
      $region65: #{tpu_custom_call.1} parent=63 // pred_check
        %p2684 = pneg %p266
      $region66: #{tpu_custom_call.1} parent=63 // pred_check_branch
        %2686 = sbr.rel (%p2684) target = $region68
      $region67: #{tpu_custom_call.1} parent=63 // pred_region
        %s2687 = smul.u32 32, %s27
        %p2688 = scmp.lt.s32.totalorder %s26, 1
        %s2689 = scalar_select %p2688, %s26, 1
        %p2690 = scmp.lt.s32.totalorder %s2687, 63
        %s2691 = scalar_select %p2690, %s2687, 63
        %s2692 = smul.addr %s2689, 64
        %s2693 = sadd.s32 %s2691, %s2692
        %s2694 = smul.addr %s2693, 8
        %s2695 = scalar_lea.vmem %s9, %s2694
      $region68: #{tpu_custom_call.1} parent=63 // pred_fallthru
        _
    $region64: #{tpu_custom_call.1} parent=5 // pred_fallthru
      _
  $region6: #{tpu_custom_call.1} parent=0 // loop_footer
    %s19 = sadd.s32 1, %s15
  $region7: #{tpu_custom_call.1} parent=0 // loop_footer_branch
    %14 = sbr.rel target = $region3
  $region8: #{tpu_custom_call.1} parent=0 // loop_exit
    _

</llo_original>
